<compile_context>
chip_gen: v7x
topology: tpu7x:2x2x1
jax: 0.10.0
libtpu: 0.0.40
codegen_flags: <defaults>
</compile_context>

<pallas_src>
import jax
import jax.numpy as jnp
import numpy as np
from jax.experimental import pallas as pl
from jax.experimental.pallas import tpu as pltpu

_GSTRIDE = 8   # per-timestep gate group stride (4 gates padded to 8 columns)


def _round_up(n, m):
    return ((n + m - 1) // m) * m


def temporal_attention_kernel(x_ref, w_blk_ref, b_col_ref, w_hh_ref,
                              w_fc_ref, b_fc_ref, out_ref):
    """One batch tile of the fused Temporal_Attention_ver5 forward.

    x_ref     : (TB, T*D)   lane-dense input block (all T steps' features)
    w_blk_ref : (T*D, T*8)  block-diagonal LSTM input weights
                            (col t*8+k = gate k of step t, order i,f,g,o)
    b_col_ref : (T*8, 1)    combined LSTM bias (b_ih + b_hh), same layout
    w_hh_ref  : (4,)  SMEM  recurrent weights (hidden_size == 1)
    w_fc_ref  : (D, OUT)    fc1 weight, transposed
    b_fc_ref  : (1, OUT)    fc1 bias
    out_ref   : (TB, OUT)
    """
    TB, TD = x_ref.shape
    D = w_fc_ref.shape[0]
    T = TD // D

    xb = x_ref[...].astype(jnp.float32)                          # (TB, T*D)

    # --- gate pre-activations for all timesteps (one MXU pass), then one
    #     2-D transpose into the lane-major layout the recurrence wants -----
    g = jnp.dot(xb, w_blk_ref[...], preferred_element_type=jnp.float32)
    gt = g.T + b_col_ref[...]                                    # (T*8, TB)

    # --- hidden_size == 1 LSTM recurrence, batch in lanes -------------------
    whh_i = w_hh_ref[0]
    whh_f = w_hh_ref[1]
    whh_g = w_hh_ref[2]
    whh_o = w_hh_ref[3]

    h = jnp.zeros((1, TB), jnp.float32)
    c = jnp.zeros((1, TB), jnp.float32)
    h_rows = []
    for t in range(T):                        # T is small & static -> unroll
        g4 = gt[_GSTRIDE * t:_GSTRIDE * t + 4, :]                # (4, TB)
        i_g = jax.nn.sigmoid(g4[0:1, :] + whh_i * h)
        f_g = jax.nn.sigmoid(g4[1:2, :] + whh_f * h)
        g_g = jnp.tanh(g4[2:3, :] + whh_g * h)
        o_g = jax.nn.sigmoid(g4[3:4, :] + whh_o * h)
        c = f_g * c + i_g * g_g
        h = o_g * jnp.tanh(c)
        h_rows.append(h)

    hs = jnp.concatenate(h_rows, axis=0)                         # (T, TB) dense
    a_bm = jax.nn.sigmoid(hs).T                                  # (TB, T)

    # --- attention-weighted temporal pooling + normalization ----------------
    att_sum = jnp.sum(a_bm, axis=1, keepdims=True)               # (TB, 1)
    wsum = xb[:, 0:D] * a_bm[:, 0:1]
    for t in range(1, T):
        wsum = wsum + xb[:, t * D:(t + 1) * D] * a_bm[:, t:t + 1]
    pooled = wsum / att_sum       # exact divide keeps tolerance vs reference

    # --- fc1 (MXU) -----------------------------------------------------------
    out_ref[...] = (jnp.dot(pooled, w_fc_ref[...],
                            preferred_element_type=jnp.float32)
                    + b_fc_ref[...])


def _pick_batch_tile(B, T, D, OUT):
    """Physically-budgeted batch tile (lane padding + double buffering)."""
    if B <= 8:
        return B
    lanes_x = _round_up(T * D, 128)
    out_pad = _round_up(OUT, 128)
    bytes_per_row = (2 * lanes_x * 4            # x block, double-buffered
                     + 8 * 128 * 4              # gates / attention / pooling temps
                     + 2 * out_pad * 4)         # out block, double-buffered
    budget = 10 * 1024 * 1024                   # fits every generation's scoped VMEM
    tb_cap = max(8, (budget // bytes_per_row) // 8 * 8)
    n_steps = max(2, pl.cdiv(B, tb_cap))        # >=2 steps so both v7x TCs get work
    if n_steps % 2:
        n_steps += 1
    tb = _round_up(pl.cdiv(B, n_steps), 8)
    return min(tb, tb_cap)


def temporal_attention_ver5(x, w_ih, w_hh, b_ih, b_hh, w_fc, b_fc):
    """x: (B, T, D) float32. Returns (B, out_num) float32."""
    x = jnp.asarray(x, jnp.float32)
    B, T, D = x.shape
    OUT = w_fc.shape[0]
    G = _GSTRIDE

    w_ih = jnp.asarray(w_ih, jnp.float32)                        # (4, D)
    w_hh_v = jnp.asarray(w_hh, jnp.float32).reshape(4)           # (4,)
    bias = (jnp.asarray(b_ih, jnp.float32)
            + jnp.asarray(b_hh, jnp.float32)).reshape(4)

    # Block-diagonal gate weight: column t*8+k holds gate k (i,f,g,o order) of
    # timestep t; padded to 8 columns per step so sublane slices of the
    # transposed gates are 8-aligned.
    w_ih_pad = jnp.pad(w_ih.T, ((0, 0), (0, G - 4)))             # (D, 8)
    w_blk = jnp.kron(jnp.eye(T, dtype=jnp.float32), w_ih_pad)    # (T*D, T*8)
    b_col = jnp.tile(jnp.pad(bias, (0, G - 4)), T).reshape(T * G, 1)

    w_fc_t = jnp.asarray(w_fc, jnp.float32).T                    # (D, OUT)
    b_fc_r = jnp.asarray(b_fc, jnp.float32).reshape(1, OUT)

    x2 = x.reshape(B, T * D)          # free: row-major (B,T,D) is contiguous

    TB = _pick_batch_tile(B, T, D, OUT)
    grid = (pl.cdiv(B, TB),)

    const = lambda i: (0, 0)
    in_specs = [
        pl.BlockSpec((TB, T * D), lambda i: (i, 0)),             # x: batch-tiled
        pl.BlockSpec((T * D, T * G), const),                     # weights resident
        pl.BlockSpec((T * G, 1), const),
        pl.BlockSpec(memory_space=pltpu.MemorySpace.SMEM),       # w_hh scalars
        pl.BlockSpec((D, OUT), const),
        pl.BlockSpec((1, OUT), const),
    ]
    out_spec = pl.BlockSpec((TB, OUT), lambda i: (i, 0))

    flops = (2 * B * (T * D) * (T * G)      # gate projection (incl. block-diag pad)
             + 30 * B * T                   # recurrence
             + 3 * B * T * D                # pooling
             + 2 * B * D * OUT)             # fc1
    transcendentals = 6 * B * T
    bytes_accessed = 4 * (B * T * D + B * OUT
                          + T * D * T * G + T * G + 4 + D * OUT + OUT)

    return pl.pallas_call(
        temporal_attention_kernel,
        grid=grid,
        in_specs=in_specs,
        out_specs=out_spec,
        out_shape=jax.ShapeDtypeStruct((B, OUT), jnp.float32),
        compiler_params=pltpu.CompilerParams(
            dimension_semantics=("parallel",),
            vmem_limit_bytes=32 * 1024 * 1024),
        cost_estimate=pl.CostEstimate(
            flops=flops, transcendentals=transcendentals,
            bytes_accessed=bytes_accessed),
    )(x2, w_blk, b_col, w_hh_v, w_fc_t, b_fc_r)


def ref_forward(x, w_ih, w_hh, b_ih, b_hh, w_fc, b_fc):
    """Pure-JAX reference matching the PyTorch forward exactly."""
    B, T, D = x.shape

    def step(carry, x_t):
        h, c = carry                                             # (B, 1)
        g = x_t @ w_ih.T + b_ih + h @ w_hh.T + b_hh              # (B, 4)
        i = jax.nn.sigmoid(g[:, 0:1])
        f = jax.nn.sigmoid(g[:, 1:2])
        gg = jnp.tanh(g[:, 2:3])
        o = jax.nn.sigmoid(g[:, 3:4])
        c = f * c + i * gg
        h = o * jnp.tanh(c)
        return (h, c), h

    init = (jnp.zeros((B, 1), jnp.float32), jnp.zeros((B, 1), jnp.float32))
    _, hs = jax.lax.scan(step, init, jnp.swapaxes(x, 0, 1))      # (T, B, 1)
    att = jax.nn.sigmoid(jnp.swapaxes(hs, 0, 1))                 # (B, T, 1)
    out = (x * att).sum(1) / att.sum(1)                          # (B, D)
    return out @ w_fc.T + b_fc


def _run_case(key, B, T, D, OUT):
    kx, k1, k2, k3, k4, k5, k6 = jax.random.split(key, 7)
    x = jax.random.normal(kx, (B, T, D), dtype=jnp.float32)

    # Deterministic parameter init (PyTorch-like uniform ranges).
    lstm_bound = 1.0                      # 1/sqrt(hidden_size), hidden_size == 1
    fc_bound = 1.0 / np.sqrt(D)
    w_ih = jax.random.uniform(k1, (4, D), jnp.float32, -lstm_bound, lstm_bound)
    w_hh = jax.random.uniform(k2, (4, 1), jnp.float32, -lstm_bound, lstm_bound)
    b_ih = jax.random.uniform(k3, (4,), jnp.float32, -lstm_bound, lstm_bound)
    b_hh = jax.random.uniform(k4, (4,), jnp.float32, -lstm_bound, lstm_bound)
    w_fc = jax.random.uniform(k5, (OUT, D), jnp.float32, -fc_bound, fc_bound)
    b_fc = jax.random.uniform(k6, (OUT,), jnp.float32, -fc_bound, fc_bound)

    out = temporal_attention_ver5(x, w_ih, w_hh, b_ih, b_hh, w_fc, b_fc)
    out = jax.block_until_ready(out)
    ref = jax.block_until_ready(
        ref_forward(x, w_ih, w_hh, b_ih, b_hh, w_fc, b_fc))
    np.testing.assert_allclose(np.asarray(out), np.asarray(ref),
                               rtol=2e-4, atol=2e-5)


if __name__ == "__main__":
    # Small shapes consistent with the module:
    #   data_length=[96, 32]  -> D = 128 ; class_length=[5, 7] -> out_num = 12
    key = jax.random.PRNGKey(0)
    k_a, k_b, k_c = jax.random.split(key, 3)
    _run_case(k_a, B=16, T=8, D=128, OUT=12)   # 2 grid steps (both v7x TCs busy)
    _run_case(k_b, B=2, T=8, D=32, OUT=12)     # tiny single-block, D < 128 path
    _run_case(k_c, B=20, T=8, D=128, OUT=12)   # partial last batch tile
    print("KERNEL_OK")
</pallas_src>

<mosaic_0001>
module attributes {stable_mosaic.version = 11 : i64} {
  func.func @temporal_attention_kernel(%arg0: i32, %arg1: memref<8x1024xf32, #tpu.memory_space<vmem>>, %arg2: memref<1024x64xf32, #tpu.memory_space<vmem>>, %arg3: memref<64x1xf32, #tpu.memory_space<vmem>>, %arg4: memref<4xf32, #tpu.memory_space<smem>>, %arg5: memref<128x12xf32, #tpu.memory_space<vmem>>, %arg6: memref<1x12xf32, #tpu.memory_space<vmem>>, %arg7: memref<8x12xf32, #tpu.memory_space<vmem>>) attributes {dimension_semantics = [#tpu.dimension_semantics<parallel>], iteration_bounds = array<i64: 2>, scalar_prefetch = 0 : i64, scratch_operands = 0 : i64, tpu.core_type = #tpu.core_type<tc>, window_params = [{transform_indices = @transform_0, window_bounds = array<i64: 8, 1024>}, {pipeline_mode = #tpu.pipeline_mode<synchronous>, transform_indices = @transform_1, window_bounds = array<i64: 1024, 64>}, {pipeline_mode = #tpu.pipeline_mode<synchronous>, transform_indices = @transform_2, window_bounds = array<i64: 64, 1>}, {transform_indices = @transform_3, window_bounds = array<i64: 4>}, {pipeline_mode = #tpu.pipeline_mode<synchronous>, transform_indices = @transform_4, window_bounds = array<i64: 128, 12>}, {pipeline_mode = #tpu.pipeline_mode<synchronous>, transform_indices = @transform_5, window_bounds = array<i64: 1, 12>}, {transform_indices = @transform_6, window_bounds = array<i64: 8, 12>}]} {
    %c0 = arith.constant 0 : index
    %c0_0 = arith.constant 0 : index
    %0 = vector.load %arg1[%c0, %c0_0] : memref<8x1024xf32, #tpu.memory_space<vmem>>, vector<8x1024xf32>
    %c0_1 = arith.constant 0 : index
    %c0_2 = arith.constant 0 : index
    %1 = vector.load %arg2[%c0_1, %c0_2] : memref<1024x64xf32, #tpu.memory_space<vmem>>, vector<1024x64xf32>
    %cst = arith.constant dense<0.000000e+00> : vector<8x64xf32>
    %2 = tpu.matmul %0, %1, %cst {dimension_numbers = #tpu.dot_dimension_numbers<[1], [0], [0], [1], [0, 0, 1, 1], [], []>} : vector<8x1024xf32>, vector<1024x64xf32>, vector<8x64xf32> -> vector<8x64xf32>
    %3 = tpu.transpose %2, [1, 0] : vector<8x64xf32> -> vector<64x8xf32>
    %c0_3 = arith.constant 0 : index
    %c0_4 = arith.constant 0 : index
    %4 = vector.load %arg3[%c0_3, %c0_4] : memref<64x1xf32, #tpu.memory_space<vmem>>, vector<64x1xf32>
    %5 = vector.broadcast %4 : vector<64x1xf32> to vector<64x8xf32>
    %6 = arith.addf %3, %5 : vector<64x8xf32>
    %c0_5 = arith.constant 0 : index
    %7 = memref.load %arg4[%c0_5] : memref<4xf32, #tpu.memory_space<smem>>
    %c1 = arith.constant 1 : index
    %8 = memref.load %arg4[%c1] : memref<4xf32, #tpu.memory_space<smem>>
    %c2 = arith.constant 2 : index
    %9 = memref.load %arg4[%c2] : memref<4xf32, #tpu.memory_space<smem>>
    %c3 = arith.constant 3 : index
    %10 = memref.load %arg4[%c3] : memref<4xf32, #tpu.memory_space<smem>>
    %cst_6 = arith.constant 0.000000e+00 : f32
    %11 = vector.broadcast %cst_6 : f32 to vector<1x8xf32>
    %cst_7 = arith.constant 0.000000e+00 : f32
    %12 = vector.broadcast %cst_7 : f32 to vector<1x8xf32>
    %13 = vector.extract_strided_slice %6 {offsets = [0, 0], sizes = [4, 8], strides = [1, 1]} : vector<64x8xf32> to vector<4x8xf32>
    %14 = vector.extract_strided_slice %13 {offsets = [0, 0], sizes = [1, 8], strides = [1, 1]} : vector<4x8xf32> to vector<1x8xf32>
    %15 = vector.broadcast %7 : f32 to vector<1x8xf32>
    %16 = arith.mulf %15, %11 : vector<1x8xf32>
    %17 = arith.addf %14, %16 : vector<1x8xf32>
    %18 = arith.negf %17 : vector<1x8xf32>
    %19 = math.exp %18 : vector<1x8xf32>
    %cst_8 = arith.constant 1.000000e+00 : f32
    %20 = vector.broadcast %cst_8 : f32 to vector<1x8xf32>
    %21 = arith.addf %20, %19 : vector<1x8xf32>
    %22 = arith.divf %20, %21 : vector<1x8xf32>
    %23 = vector.extract_strided_slice %13 {offsets = [1, 0], sizes = [1, 8], strides = [1, 1]} : vector<4x8xf32> to vector<1x8xf32>
    %24 = vector.broadcast %8 : f32 to vector<1x8xf32>
    %25 = arith.mulf %24, %11 : vector<1x8xf32>
    %26 = arith.addf %23, %25 : vector<1x8xf32>
    %27 = arith.negf %26 : vector<1x8xf32>
    %28 = math.exp %27 : vector<1x8xf32>
    %cst_9 = arith.constant 1.000000e+00 : f32
    %29 = vector.broadcast %cst_9 : f32 to vector<1x8xf32>
    %30 = arith.addf %29, %28 : vector<1x8xf32>
    %31 = arith.divf %29, %30 : vector<1x8xf32>
    %32 = vector.extract_strided_slice %13 {offsets = [2, 0], sizes = [1, 8], strides = [1, 1]} : vector<4x8xf32> to vector<1x8xf32>
    %33 = vector.broadcast %9 : f32 to vector<1x8xf32>
    %34 = arith.mulf %33, %11 : vector<1x8xf32>
    %35 = arith.addf %32, %34 : vector<1x8xf32>
    %36 = math.tanh %35 : vector<1x8xf32>
    %37 = vector.extract_strided_slice %13 {offsets = [3, 0], sizes = [1, 8], strides = [1, 1]} : vector<4x8xf32> to vector<1x8xf32>
    %38 = vector.broadcast %10 : f32 to vector<1x8xf32>
    %39 = arith.mulf %38, %11 : vector<1x8xf32>
    %40 = arith.addf %37, %39 : vector<1x8xf32>
    %41 = arith.negf %40 : vector<1x8xf32>
    %42 = math.exp %41 : vector<1x8xf32>
    %cst_10 = arith.constant 1.000000e+00 : f32
    %43 = vector.broadcast %cst_10 : f32 to vector<1x8xf32>
    %44 = arith.addf %43, %42 : vector<1x8xf32>
    %45 = arith.divf %43, %44 : vector<1x8xf32>
    %46 = arith.mulf %31, %12 : vector<1x8xf32>
    %47 = arith.mulf %22, %36 : vector<1x8xf32>
    %48 = arith.addf %46, %47 : vector<1x8xf32>
    %49 = math.tanh %48 : vector<1x8xf32>
    %50 = arith.mulf %45, %49 : vector<1x8xf32>
    %51 = vector.extract_strided_slice %6 {offsets = [8, 0], sizes = [4, 8], strides = [1, 1]} : vector<64x8xf32> to vector<4x8xf32>
    %52 = vector.extract_strided_slice %51 {offsets = [0, 0], sizes = [1, 8], strides = [1, 1]} : vector<4x8xf32> to vector<1x8xf32>
    %53 = vector.broadcast %7 : f32 to vector<1x8xf32>
    %54 = arith.mulf %53, %50 : vector<1x8xf32>
    %55 = arith.addf %52, %54 : vector<1x8xf32>
    %56 = arith.negf %55 : vector<1x8xf32>
    %57 = math.exp %56 : vector<1x8xf32>
    %cst_11 = arith.constant 1.000000e+00 : f32
    %58 = vector.broadcast %cst_11 : f32 to vector<1x8xf32>
    %59 = arith.addf %58, %57 : vector<1x8xf32>
    %60 = arith.divf %58, %59 : vector<1x8xf32>
    %61 = vector.extract_strided_slice %51 {offsets = [1, 0], sizes = [1, 8], strides = [1, 1]} : vector<4x8xf32> to vector<1x8xf32>
    %62 = vector.broadcast %8 : f32 to vector<1x8xf32>
    %63 = arith.mulf %62, %50 : vector<1x8xf32>
    %64 = arith.addf %61, %63 : vector<1x8xf32>
    %65 = arith.negf %64 : vector<1x8xf32>
    %66 = math.exp %65 : vector<1x8xf32>
    %cst_12 = arith.constant 1.000000e+00 : f32
    %67 = vector.broadcast %cst_12 : f32 to vector<1x8xf32>
    %68 = arith.addf %67, %66 : vector<1x8xf32>
    %69 = arith.divf %67, %68 : vector<1x8xf32>
    %70 = vector.extract_strided_slice %51 {offsets = [2, 0], sizes = [1, 8], strides = [1, 1]} : vector<4x8xf32> to vector<1x8xf32>
    %71 = vector.broadcast %9 : f32 to vector<1x8xf32>
    %72 = arith.mulf %71, %50 : vector<1x8xf32>
    %73 = arith.addf %70, %72 : vector<1x8xf32>
    %74 = math.tanh %73 : vector<1x8xf32>
    %75 = vector.extract_strided_slice %51 {offsets = [3, 0], sizes = [1, 8], strides = [1, 1]} : vector<4x8xf32> to vector<1x8xf32>
    %76 = vector.broadcast %10 : f32 to vector<1x8xf32>
    %77 = arith.mulf %76, %50 : vector<1x8xf32>
    %78 = arith.addf %75, %77 : vector<1x8xf32>
    %79 = arith.negf %78 : vector<1x8xf32>
    %80 = math.exp %79 : vector<1x8xf32>
    %cst_13 = arith.constant 1.000000e+00 : f32
    %81 = vector.broadcast %cst_13 : f32 to vector<1x8xf32>
    %82 = arith.addf %81, %80 : vector<1x8xf32>
    %83 = arith.divf %81, %82 : vector<1x8xf32>
    %84 = arith.mulf %69, %48 : vector<1x8xf32>
    %85 = arith.mulf %60, %74 : vector<1x8xf32>
    %86 = arith.addf %84, %85 : vector<1x8xf32>
    %87 = math.tanh %86 : vector<1x8xf32>
    %88 = arith.mulf %83, %87 : vector<1x8xf32>
    %89 = vector.extract_strided_slice %6 {offsets = [16, 0], sizes = [4, 8], strides = [1, 1]} : vector<64x8xf32> to vector<4x8xf32>
    %90 = vector.extract_strided_slice %89 {offsets = [0, 0], sizes = [1, 8], strides = [1, 1]} : vector<4x8xf32> to vector<1x8xf32>
    %91 = vector.broadcast %7 : f32 to vector<1x8xf32>
    %92 = arith.mulf %91, %88 : vector<1x8xf32>
    %93 = arith.addf %90, %92 : vector<1x8xf32>
    %94 = arith.negf %93 : vector<1x8xf32>
    %95 = math.exp %94 : vector<1x8xf32>
    %cst_14 = arith.constant 1.000000e+00 : f32
    %96 = vector.broadcast %cst_14 : f32 to vector<1x8xf32>
    %97 = arith.addf %96, %95 : vector<1x8xf32>
    %98 = arith.divf %96, %97 : vector<1x8xf32>
    %99 = vector.extract_strided_slice %89 {offsets = [1, 0], sizes = [1, 8], strides = [1, 1]} : vector<4x8xf32> to vector<1x8xf32>
    %100 = vector.broadcast %8 : f32 to vector<1x8xf32>
    %101 = arith.mulf %100, %88 : vector<1x8xf32>
    %102 = arith.addf %99, %101 : vector<1x8xf32>
    %103 = arith.negf %102 : vector<1x8xf32>
    %104 = math.exp %103 : vector<1x8xf32>
    %cst_15 = arith.constant 1.000000e+00 : f32
    %105 = vector.broadcast %cst_15 : f32 to vector<1x8xf32>
    %106 = arith.addf %105, %104 : vector<1x8xf32>
    %107 = arith.divf %105, %106 : vector<1x8xf32>
    %108 = vector.extract_strided_slice %89 {offsets = [2, 0], sizes = [1, 8], strides = [1, 1]} : vector<4x8xf32> to vector<1x8xf32>
    %109 = vector.broadcast %9 : f32 to vector<1x8xf32>
    %110 = arith.mulf %109, %88 : vector<1x8xf32>
    %111 = arith.addf %108, %110 : vector<1x8xf32>
    %112 = math.tanh %111 : vector<1x8xf32>
    %113 = vector.extract_strided_slice %89 {offsets = [3, 0], sizes = [1, 8], strides = [1, 1]} : vector<4x8xf32> to vector<1x8xf32>
    %114 = vector.broadcast %10 : f32 to vector<1x8xf32>
    %115 = arith.mulf %114, %88 : vector<1x8xf32>
    %116 = arith.addf %113, %115 : vector<1x8xf32>
    %117 = arith.negf %116 : vector<1x8xf32>
    %118 = math.exp %117 : vector<1x8xf32>
    %cst_16 = arith.constant 1.000000e+00 : f32
    %119 = vector.broadcast %cst_16 : f32 to vector<1x8xf32>
    %120 = arith.addf %119, %118 : vector<1x8xf32>
    %121 = arith.divf %119, %120 : vector<1x8xf32>
    %122 = arith.mulf %107, %86 : vector<1x8xf32>
    %123 = arith.mulf %98, %112 : vector<1x8xf32>
    %124 = arith.addf %122, %123 : vector<1x8xf32>
    %125 = math.tanh %124 : vector<1x8xf32>
    %126 = arith.mulf %121, %125 : vector<1x8xf32>
    %127 = vector.extract_strided_slice %6 {offsets = [24, 0], sizes = [4, 8], strides = [1, 1]} : vector<64x8xf32> to vector<4x8xf32>
    %128 = vector.extract_strided_slice %127 {offsets = [0, 0], sizes = [1, 8], strides = [1, 1]} : vector<4x8xf32> to vector<1x8xf32>
    %129 = vector.broadcast %7 : f32 to vector<1x8xf32>
    %130 = arith.mulf %129, %126 : vector<1x8xf32>
    %131 = arith.addf %128, %130 : vector<1x8xf32>
    %132 = arith.negf %131 : vector<1x8xf32>
    %133 = math.exp %132 : vector<1x8xf32>
    %cst_17 = arith.constant 1.000000e+00 : f32
    %134 = vector.broadcast %cst_17 : f32 to vector<1x8xf32>
    %135 = arith.addf %134, %133 : vector<1x8xf32>
    %136 = arith.divf %134, %135 : vector<1x8xf32>
    %137 = vector.extract_strided_slice %127 {offsets = [1, 0], sizes = [1, 8], strides = [1, 1]} : vector<4x8xf32> to vector<1x8xf32>
    %138 = vector.broadcast %8 : f32 to vector<1x8xf32>
    %139 = arith.mulf %138, %126 : vector<1x8xf32>
    %140 = arith.addf %137, %139 : vector<1x8xf32>
    %141 = arith.negf %140 : vector<1x8xf32>
    %142 = math.exp %141 : vector<1x8xf32>
    %cst_18 = arith.constant 1.000000e+00 : f32
    %143 = vector.broadcast %cst_18 : f32 to vector<1x8xf32>
    %144 = arith.addf %143, %142 : vector<1x8xf32>
    %145 = arith.divf %143, %144 : vector<1x8xf32>
    %146 = vector.extract_strided_slice %127 {offsets = [2, 0], sizes = [1, 8], strides = [1, 1]} : vector<4x8xf32> to vector<1x8xf32>
    %147 = vector.broadcast %9 : f32 to vector<1x8xf32>
    %148 = arith.mulf %147, %126 : vector<1x8xf32>
    %149 = arith.addf %146, %148 : vector<1x8xf32>
    %150 = math.tanh %149 : vector<1x8xf32>
    %151 = vector.extract_strided_slice %127 {offsets = [3, 0], sizes = [1, 8], strides = [1, 1]} : vector<4x8xf32> to vector<1x8xf32>
    %152 = vector.broadcast %10 : f32 to vector<1x8xf32>
    %153 = arith.mulf %152, %126 : vector<1x8xf32>
    %154 = arith.addf %151, %153 : vector<1x8xf32>
    %155 = arith.negf %154 : vector<1x8xf32>
    %156 = math.exp %155 : vector<1x8xf32>
    %cst_19 = arith.constant 1.000000e+00 : f32
    %157 = vector.broadcast %cst_19 : f32 to vector<1x8xf32>
    %158 = arith.addf %157, %156 : vector<1x8xf32>
    %159 = arith.divf %157, %158 : vector<1x8xf32>
    %160 = arith.mulf %145, %124 : vector<1x8xf32>
    %161 = arith.mulf %136, %150 : vector<1x8xf32>
    %162 = arith.addf %160, %161 : vector<1x8xf32>
    %163 = math.tanh %162 : vector<1x8xf32>
    %164 = arith.mulf %159, %163 : vector<1x8xf32>
    %165 = vector.extract_strided_slice %6 {offsets = [32, 0], sizes = [4, 8], strides = [1, 1]} : vector<64x8xf32> to vector<4x8xf32>
    %166 = vector.extract_strided_slice %165 {offsets = [0, 0], sizes = [1, 8], strides = [1, 1]} : vector<4x8xf32> to vector<1x8xf32>
    %167 = vector.broadcast %7 : f32 to vector<1x8xf32>
    %168 = arith.mulf %167, %164 : vector<1x8xf32>
    %169 = arith.addf %166, %168 : vector<1x8xf32>
    %170 = arith.negf %169 : vector<1x8xf32>
    %171 = math.exp %170 : vector<1x8xf32>
    %cst_20 = arith.constant 1.000000e+00 : f32
    %172 = vector.broadcast %cst_20 : f32 to vector<1x8xf32>
    %173 = arith.addf %172, %171 : vector<1x8xf32>
    %174 = arith.divf %172, %173 : vector<1x8xf32>
    %175 = vector.extract_strided_slice %165 {offsets = [1, 0], sizes = [1, 8], strides = [1, 1]} : vector<4x8xf32> to vector<1x8xf32>
    %176 = vector.broadcast %8 : f32 to vector<1x8xf32>
    %177 = arith.mulf %176, %164 : vector<1x8xf32>
    %178 = arith.addf %175, %177 : vector<1x8xf32>
    %179 = arith.negf %178 : vector<1x8xf32>
    %180 = math.exp %179 : vector<1x8xf32>
    %cst_21 = arith.constant 1.000000e+00 : f32
    %181 = vector.broadcast %cst_21 : f32 to vector<1x8xf32>
    %182 = arith.addf %181, %180 : vector<1x8xf32>
    %183 = arith.divf %181, %182 : vector<1x8xf32>
    %184 = vector.extract_strided_slice %165 {offsets = [2, 0], sizes = [1, 8], strides = [1, 1]} : vector<4x8xf32> to vector<1x8xf32>
    %185 = vector.broadcast %9 : f32 to vector<1x8xf32>
    %186 = arith.mulf %185, %164 : vector<1x8xf32>
    %187 = arith.addf %184, %186 : vector<1x8xf32>
    %188 = math.tanh %187 : vector<1x8xf32>
    %189 = vector.extract_strided_slice %165 {offsets = [3, 0], sizes = [1, 8], strides = [1, 1]} : vector<4x8xf32> to vector<1x8xf32>
    %190 = vector.broadcast %10 : f32 to vector<1x8xf32>
    %191 = arith.mulf %190, %164 : vector<1x8xf32>
    %192 = arith.addf %189, %191 : vector<1x8xf32>
    %193 = arith.negf %192 : vector<1x8xf32>
    %194 = math.exp %193 : vector<1x8xf32>
    %cst_22 = arith.constant 1.000000e+00 : f32
    %195 = vector.broadcast %cst_22 : f32 to vector<1x8xf32>
    %196 = arith.addf %195, %194 : vector<1x8xf32>
    %197 = arith.divf %195, %196 : vector<1x8xf32>
    %198 = arith.mulf %183, %162 : vector<1x8xf32>
    %199 = arith.mulf %174, %188 : vector<1x8xf32>
    %200 = arith.addf %198, %199 : vector<1x8xf32>
    %201 = math.tanh %200 : vector<1x8xf32>
    %202 = arith.mulf %197, %201 : vector<1x8xf32>
    %203 = vector.extract_strided_slice %6 {offsets = [40, 0], sizes = [4, 8], strides = [1, 1]} : vector<64x8xf32> to vector<4x8xf32>
    %204 = vector.extract_strided_slice %203 {offsets = [0, 0], sizes = [1, 8], strides = [1, 1]} : vector<4x8xf32> to vector<1x8xf32>
    %205 = vector.broadcast %7 : f32 to vector<1x8xf32>
    %206 = arith.mulf %205, %202 : vector<1x8xf32>
    %207 = arith.addf %204, %206 : vector<1x8xf32>
    %208 = arith.negf %207 : vector<1x8xf32>
    %209 = math.exp %208 : vector<1x8xf32>
    %cst_23 = arith.constant 1.000000e+00 : f32
    %210 = vector.broadcast %cst_23 : f32 to vector<1x8xf32>
    %211 = arith.addf %210, %209 : vector<1x8xf32>
    %212 = arith.divf %210, %211 : vector<1x8xf32>
    %213 = vector.extract_strided_slice %203 {offsets = [1, 0], sizes = [1, 8], strides = [1, 1]} : vector<4x8xf32> to vector<1x8xf32>
    %214 = vector.broadcast %8 : f32 to vector<1x8xf32>
    %215 = arith.mulf %214, %202 : vector<1x8xf32>
    %216 = arith.addf %213, %215 : vector<1x8xf32>
    %217 = arith.negf %216 : vector<1x8xf32>
    %218 = math.exp %217 : vector<1x8xf32>
    %cst_24 = arith.constant 1.000000e+00 : f32
    %219 = vector.broadcast %cst_24 : f32 to vector<1x8xf32>
    %220 = arith.addf %219, %218 : vector<1x8xf32>
    %221 = arith.divf %219, %220 : vector<1x8xf32>
    %222 = vector.extract_strided_slice %203 {offsets = [2, 0], sizes = [1, 8], strides = [1, 1]} : vector<4x8xf32> to vector<1x8xf32>
    %223 = vector.broadcast %9 : f32 to vector<1x8xf32>
    %224 = arith.mulf %223, %202 : vector<1x8xf32>
    %225 = arith.addf %222, %224 : vector<1x8xf32>
    %226 = math.tanh %225 : vector<1x8xf32>
    %227 = vector.extract_strided_slice %203 {offsets = [3, 0], sizes = [1, 8], strides = [1, 1]} : vector<4x8xf32> to vector<1x8xf32>
    %228 = vector.broadcast %10 : f32 to vector<1x8xf32>
    %229 = arith.mulf %228, %202 : vector<1x8xf32>
    %230 = arith.addf %227, %229 : vector<1x8xf32>
    %231 = arith.negf %230 : vector<1x8xf32>
    %232 = math.exp %231 : vector<1x8xf32>
    %cst_25 = arith.constant 1.000000e+00 : f32
    %233 = vector.broadcast %cst_25 : f32 to vector<1x8xf32>
    %234 = arith.addf %233, %232 : vector<1x8xf32>
    %235 = arith.divf %233, %234 : vector<1x8xf32>
    %236 = arith.mulf %221, %200 : vector<1x8xf32>
    %237 = arith.mulf %212, %226 : vector<1x8xf32>
    %238 = arith.addf %236, %237 : vector<1x8xf32>
    %239 = math.tanh %238 : vector<1x8xf32>
    %240 = arith.mulf %235, %239 : vector<1x8xf32>
    %241 = vector.extract_strided_slice %6 {offsets = [48, 0], sizes = [4, 8], strides = [1, 1]} : vector<64x8xf32> to vector<4x8xf32>
    %242 = vector.extract_strided_slice %241 {offsets = [0, 0], sizes = [1, 8], strides = [1, 1]} : vector<4x8xf32> to vector<1x8xf32>
    %243 = vector.broadcast %7 : f32 to vector<1x8xf32>
    %244 = arith.mulf %243, %240 : vector<1x8xf32>
    %245 = arith.addf %242, %244 : vector<1x8xf32>
    %246 = arith.negf %245 : vector<1x8xf32>
    %247 = math.exp %246 : vector<1x8xf32>
    %cst_26 = arith.constant 1.000000e+00 : f32
    %248 = vector.broadcast %cst_26 : f32 to vector<1x8xf32>
    %249 = arith.addf %248, %247 : vector<1x8xf32>
    %250 = arith.divf %248, %249 : vector<1x8xf32>
    %251 = vector.extract_strided_slice %241 {offsets = [1, 0], sizes = [1, 8], strides = [1, 1]} : vector<4x8xf32> to vector<1x8xf32>
    %252 = vector.broadcast %8 : f32 to vector<1x8xf32>
    %253 = arith.mulf %252, %240 : vector<1x8xf32>
    %254 = arith.addf %251, %253 : vector<1x8xf32>
    %255 = arith.negf %254 : vector<1x8xf32>
    %256 = math.exp %255 : vector<1x8xf32>
    %cst_27 = arith.constant 1.000000e+00 : f32
    %257 = vector.broadcast %cst_27 : f32 to vector<1x8xf32>
    %258 = arith.addf %257, %256 : vector<1x8xf32>
    %259 = arith.divf %257, %258 : vector<1x8xf32>
    %260 = vector.extract_strided_slice %241 {offsets = [2, 0], sizes = [1, 8], strides = [1, 1]} : vector<4x8xf32> to vector<1x8xf32>
    %261 = vector.broadcast %9 : f32 to vector<1x8xf32>
    %262 = arith.mulf %261, %240 : vector<1x8xf32>
    %263 = arith.addf %260, %262 : vector<1x8xf32>
    %264 = math.tanh %263 : vector<1x8xf32>
    %265 = vector.extract_strided_slice %241 {offsets = [3, 0], sizes = [1, 8], strides = [1, 1]} : vector<4x8xf32> to vector<1x8xf32>
    %266 = vector.broadcast %10 : f32 to vector<1x8xf32>
    %267 = arith.mulf %266, %240 : vector<1x8xf32>
    %268 = arith.addf %265, %267 : vector<1x8xf32>
    %269 = arith.negf %268 : vector<1x8xf32>
    %270 = math.exp %269 : vector<1x8xf32>
    %cst_28 = arith.constant 1.000000e+00 : f32
    %271 = vector.broadcast %cst_28 : f32 to vector<1x8xf32>
    %272 = arith.addf %271, %270 : vector<1x8xf32>
    %273 = arith.divf %271, %272 : vector<1x8xf32>
    %274 = arith.mulf %259, %238 : vector<1x8xf32>
    %275 = arith.mulf %250, %264 : vector<1x8xf32>
    %276 = arith.addf %274, %275 : vector<1x8xf32>
    %277 = math.tanh %276 : vector<1x8xf32>
    %278 = arith.mulf %273, %277 : vector<1x8xf32>
    %279 = vector.extract_strided_slice %6 {offsets = [56, 0], sizes = [4, 8], strides = [1, 1]} : vector<64x8xf32> to vector<4x8xf32>
    %280 = vector.extract_strided_slice %279 {offsets = [0, 0], sizes = [1, 8], strides = [1, 1]} : vector<4x8xf32> to vector<1x8xf32>
    %281 = vector.broadcast %7 : f32 to vector<1x8xf32>
    %282 = arith.mulf %281, %278 : vector<1x8xf32>
    %283 = arith.addf %280, %282 : vector<1x8xf32>
    %284 = arith.negf %283 : vector<1x8xf32>
    %285 = math.exp %284 : vector<1x8xf32>
    %cst_29 = arith.constant 1.000000e+00 : f32
    %286 = vector.broadcast %cst_29 : f32 to vector<1x8xf32>
    %287 = arith.addf %286, %285 : vector<1x8xf32>
    %288 = arith.divf %286, %287 : vector<1x8xf32>
    %289 = vector.extract_strided_slice %279 {offsets = [1, 0], sizes = [1, 8], strides = [1, 1]} : vector<4x8xf32> to vector<1x8xf32>
    %290 = vector.broadcast %8 : f32 to vector<1x8xf32>
    %291 = arith.mulf %290, %278 : vector<1x8xf32>
    %292 = arith.addf %289, %291 : vector<1x8xf32>
    %293 = arith.negf %292 : vector<1x8xf32>
    %294 = math.exp %293 : vector<1x8xf32>
    %cst_30 = arith.constant 1.000000e+00 : f32
    %295 = vector.broadcast %cst_30 : f32 to vector<1x8xf32>
    %296 = arith.addf %295, %294 : vector<1x8xf32>
    %297 = arith.divf %295, %296 : vector<1x8xf32>
    %298 = vector.extract_strided_slice %279 {offsets = [2, 0], sizes = [1, 8], strides = [1, 1]} : vector<4x8xf32> to vector<1x8xf32>
    %299 = vector.broadcast %9 : f32 to vector<1x8xf32>
    %300 = arith.mulf %299, %278 : vector<1x8xf32>
    %301 = arith.addf %298, %300 : vector<1x8xf32>
    %302 = math.tanh %301 : vector<1x8xf32>
    %303 = vector.extract_strided_slice %279 {offsets = [3, 0], sizes = [1, 8], strides = [1, 1]} : vector<4x8xf32> to vector<1x8xf32>
    %304 = vector.broadcast %10 : f32 to vector<1x8xf32>
    %305 = arith.mulf %304, %278 : vector<1x8xf32>
    %306 = arith.addf %303, %305 : vector<1x8xf32>
    %307 = arith.negf %306 : vector<1x8xf32>
    %308 = math.exp %307 : vector<1x8xf32>
    %cst_31 = arith.constant 1.000000e+00 : f32
    %309 = vector.broadcast %cst_31 : f32 to vector<1x8xf32>
    %310 = arith.addf %309, %308 : vector<1x8xf32>
    %311 = arith.divf %309, %310 : vector<1x8xf32>
    %312 = arith.mulf %297, %276 : vector<1x8xf32>
    %313 = arith.mulf %288, %302 : vector<1x8xf32>
    %314 = arith.addf %312, %313 : vector<1x8xf32>
    %315 = math.tanh %314 : vector<1x8xf32>
    %316 = arith.mulf %311, %315 : vector<1x8xf32>
    %317 = tpu.concatenate %50, %88, %126, %164, %202, %240, %278, %316 in 0 : vector<1x8xf32>, vector<1x8xf32>, vector<1x8xf32>, vector<1x8xf32>, vector<1x8xf32>, vector<1x8xf32>, vector<1x8xf32>, vector<1x8xf32> -> vector<8x8xf32>
    %318 = arith.negf %317 : vector<8x8xf32>
    %319 = math.exp %318 : vector<8x8xf32>
    %cst_32 = arith.constant 1.000000e+00 : f32
    %320 = vector.broadcast %cst_32 : f32 to vector<8x8xf32>
    %321 = arith.addf %320, %319 : vector<8x8xf32>
    %322 = arith.divf %320, %321 : vector<8x8xf32>
    %323 = tpu.transpose %322, [1, 0] : vector<8x8xf32> -> vector<8x8xf32>
    %cst_33 = arith.constant dense<0.000000e+00> : vector<8xf32>
    %324 = vector.multi_reduction <add>, %323, %cst_33 [1] : vector<8x8xf32> to vector<8xf32>
    %325 = vector.shape_cast %324 : vector<8xf32> to vector<8x1xf32>
    %326 = vector.extract_strided_slice %0 {offsets = [0, 0], sizes = [8, 128], strides = [1, 1]} : vector<8x1024xf32> to vector<8x128xf32>
    %327 = vector.extract_strided_slice %323 {offsets = [0, 0], sizes = [8, 1], strides = [1, 1]} : vector<8x8xf32> to vector<8x1xf32>
    %328 = vector.broadcast %327 : vector<8x1xf32> to vector<8x128xf32>
    %329 = arith.mulf %326, %328 : vector<8x128xf32>
    %330 = vector.extract_strided_slice %0 {offsets = [0, 128], sizes = [8, 128], strides = [1, 1]} : vector<8x1024xf32> to vector<8x128xf32>
    %331 = vector.extract_strided_slice %323 {offsets = [0, 1], sizes = [8, 1], strides = [1, 1]} : vector<8x8xf32> to vector<8x1xf32>
    %332 = vector.broadcast %331 : vector<8x1xf32> to vector<8x128xf32>
    %333 = arith.mulf %330, %332 : vector<8x128xf32>
    %334 = arith.addf %329, %333 : vector<8x128xf32>
    %335 = vector.extract_strided_slice %0 {offsets = [0, 256], sizes = [8, 128], strides = [1, 1]} : vector<8x1024xf32> to vector<8x128xf32>
    %336 = vector.extract_strided_slice %323 {offsets = [0, 2], sizes = [8, 1], strides = [1, 1]} : vector<8x8xf32> to vector<8x1xf32>
    %337 = vector.broadcast %336 : vector<8x1xf32> to vector<8x128xf32>
    %338 = arith.mulf %335, %337 : vector<8x128xf32>
    %339 = arith.addf %334, %338 : vector<8x128xf32>
    %340 = vector.extract_strided_slice %0 {offsets = [0, 384], sizes = [8, 128], strides = [1, 1]} : vector<8x1024xf32> to vector<8x128xf32>
    %341 = vector.extract_strided_slice %323 {offsets = [0, 3], sizes = [8, 1], strides = [1, 1]} : vector<8x8xf32> to vector<8x1xf32>
    %342 = vector.broadcast %341 : vector<8x1xf32> to vector<8x128xf32>
    %343 = arith.mulf %340, %342 : vector<8x128xf32>
    %344 = arith.addf %339, %343 : vector<8x128xf32>
    %345 = vector.extract_strided_slice %0 {offsets = [0, 512], sizes = [8, 128], strides = [1, 1]} : vector<8x1024xf32> to vector<8x128xf32>
    %346 = vector.extract_strided_slice %323 {offsets = [0, 4], sizes = [8, 1], strides = [1, 1]} : vector<8x8xf32> to vector<8x1xf32>
    %347 = vector.broadcast %346 : vector<8x1xf32> to vector<8x128xf32>
    %348 = arith.mulf %345, %347 : vector<8x128xf32>
    %349 = arith.addf %344, %348 : vector<8x128xf32>
    %350 = vector.extract_strided_slice %0 {offsets = [0, 640], sizes = [8, 128], strides = [1, 1]} : vector<8x1024xf32> to vector<8x128xf32>
    %351 = vector.extract_strided_slice %323 {offsets = [0, 5], sizes = [8, 1], strides = [1, 1]} : vector<8x8xf32> to vector<8x1xf32>
    %352 = vector.broadcast %351 : vector<8x1xf32> to vector<8x128xf32>
    %353 = arith.mulf %350, %352 : vector<8x128xf32>
    %354 = arith.addf %349, %353 : vector<8x128xf32>
    %355 = vector.extract_strided_slice %0 {offsets = [0, 768], sizes = [8, 128], strides = [1, 1]} : vector<8x1024xf32> to vector<8x128xf32>
    %356 = vector.extract_strided_slice %323 {offsets = [0, 6], sizes = [8, 1], strides = [1, 1]} : vector<8x8xf32> to vector<8x1xf32>
    %357 = vector.broadcast %356 : vector<8x1xf32> to vector<8x128xf32>
    %358 = arith.mulf %355, %357 : vector<8x128xf32>
    %359 = arith.addf %354, %358 : vector<8x128xf32>
    %360 = vector.extract_strided_slice %0 {offsets = [0, 896], sizes = [8, 128], strides = [1, 1]} : vector<8x1024xf32> to vector<8x128xf32>
    %361 = vector.extract_strided_slice %323 {offsets = [0, 7], sizes = [8, 1], strides = [1, 1]} : vector<8x8xf32> to vector<8x1xf32>
    %362 = vector.broadcast %361 : vector<8x1xf32> to vector<8x128xf32>
    %363 = arith.mulf %360, %362 : vector<8x128xf32>
    %364 = arith.addf %359, %363 : vector<8x128xf32>
    %365 = vector.broadcast %325 : vector<8x1xf32> to vector<8x128xf32>
    %366 = arith.divf %364, %365 : vector<8x128xf32>
    %c0_34 = arith.constant 0 : index
    %c0_35 = arith.constant 0 : index
    %367 = vector.load %arg5[%c0_34, %c0_35] : memref<128x12xf32, #tpu.memory_space<vmem>>, vector<128x12xf32>
    %cst_36 = arith.constant dense<0.000000e+00> : vector<8x12xf32>
    %368 = tpu.matmul %366, %367, %cst_36 {dimension_numbers = #tpu.dot_dimension_numbers<[1], [0], [0], [1], [0, 0, 1, 1], [], []>} : vector<8x128xf32>, vector<128x12xf32>, vector<8x12xf32> -> vector<8x12xf32>
    %c0_37 = arith.constant 0 : index
    %c0_38 = arith.constant 0 : index
    %369 = vector.load %arg6[%c0_37, %c0_38] : memref<1x12xf32, #tpu.memory_space<vmem>>, vector<1x12xf32>
    %370 = vector.broadcast %369 : vector<1x12xf32> to vector<8x12xf32>
    %371 = arith.addf %368, %370 : vector<8x12xf32>
    %c0_39 = arith.constant 0 : index
    %c0_40 = arith.constant 0 : index
    %372 = vector.load %arg7[%c0_39, %c0_40] : memref<8x12xf32, #tpu.memory_space<vmem>>, vector<8x12xf32>
    tpu.vector_store %arg7[%c0_39, %c0_40], %371 {strides = array<i32>} : memref<8x12xf32, #tpu.memory_space<vmem>>, vector<8x12xf32>,
    return
  }
  func.func @transform_0(%arg0: i32) -> (i32, i32) {
    %c0_i32 = arith.constant 0 : i32
    %c0_i32_0 = arith.constant 0 : i32
    return %arg0, %c0_i32 : i32, i32
  }
  func.func @transform_1(%arg0: i32) -> (i32, i32) {
    %c0_i32 = arith.constant 0 : i32
    %c0_i32_0 = arith.constant 0 : i32
    %c0_i32_1 = arith.constant 0 : i32
    return %c0_i32, %c0_i32_0 : i32, i32
  }
  func.func @transform_2(%arg0: i32) -> (i32, i32) {
    %c0_i32 = arith.constant 0 : i32
    %c0_i32_0 = arith.constant 0 : i32
    %c0_i32_1 = arith.constant 0 : i32
    return %c0_i32, %c0_i32_0 : i32, i32
  }
  func.func @transform_3(%arg0: i32) -> i32 {
    %c0_i32 = arith.constant 0 : i32
    %c0_i32_0 = arith.constant 0 : i32
    return %c0_i32 : i32
  }
  func.func @transform_4(%arg0: i32) -> (i32, i32) {
    %c0_i32 = arith.constant 0 : i32
    %c0_i32_0 = arith.constant 0 : i32
    %c0_i32_1 = arith.constant 0 : i32
    return %c0_i32, %c0_i32_0 : i32, i32
  }
  func.func @transform_5(%arg0: i32) -> (i32, i32) {
    %c0_i32 = arith.constant 0 : i32
    %c0_i32_0 = arith.constant 0 : i32
    %c0_i32_1 = arith.constant 0 : i32
    return %c0_i32, %c0_i32_0 : i32, i32
  }
  func.func @transform_6(%arg0: i32) -> (i32, i32) {
    %c0_i32 = arith.constant 0 : i32
    %c0_i32_0 = arith.constant 0 : i32
    return %arg0, %c0_i32 : i32, i32
  }
}

</mosaic_0001>

<llo_original>
// kernel: tpu_custom_call.1
$region0: #{tpu_custom_call.1}
  #allocation0 [shape = 'u32[]', space=smem, size = 0x4, offset = 0x4, fixed_abs, tag = 'smem constant byte address 0x4 - core index']
  #allocation1 [shape = 'u32[144,128]{1,0:T(1,128)}', space=vmem, size = 0x12000, scoped, tag = 'internal scratch']
  %s0 = inlined_call_operand.vmem [shape: f32[16,1024], index: 0, kind: input, shape index: {}]
  %s1 = inlined_call_operand.vmem [shape: f32[1024,64], index: 1, kind: input, shape index: {}]
  %s2 = inlined_call_operand.vmem [shape: f32[64,1], index: 2, kind: input, shape index: {}]
  %s3 = inlined_call_operand.vmem [shape: f32[4], index: 3, kind: input, shape index: {}]
  %s4 = inlined_call_operand.vmem [shape: f32[128,12], index: 4, kind: input, shape index: {}]
  %s5 = inlined_call_operand.vmem [shape: f32[1,12], index: 5, kind: input, shape index: {}]
  %s6 = inlined_call_operand.hbm [shape: f32[16,12], index: 6, kind: output, shape index: {}]
  %s7 = sld [smem:[#allocation0]]
  $region61: #{tpu_custom_call.1} parent=0
    _
  %s9 = ssub.s32 1, %s7
  %s10 = scalar_select 0, %s9, %s7
  $region1: #{tpu_custom_call.1} parent=0
    #allocation2 [shape = 'u8[512]{0}', space=smem, size = 0x200, scoped, tag = 'input window, operand 3, single buffered']
    #allocation3 [shape = 's32[2]{0}', space=sflag, size = 0x8, scoped, tag = 'scoped memory for tpu_custom_call.1']
    #allocation4 [shape = 's32[2]{0}', space=sflag, size = 0x8, scoped, tag = 'scoped memory for tpu_custom_call.1']
    #allocation5 [shape = 'u8[8192]{0}', space=vmem, size = 0x2000, scoped, tag = 'output window, operand 0']
    %11 = vsyncpa [#allocation4], 0
    %12 = vsyncpa [#allocation3], 0
    %s13 = scalar_lea.sflag [#allocation3], 1
    %14 = vsyncpa %s13, 0
    loop: start=0, step=1, limit=4
    $region2: #{tpu_custom_call.1} parent=1 // loop_pre_header
      _
    $region3: #{tpu_custom_call.1} parent=1 // loop_header
      %s16 = sphi 0, %s20
      %p17 = scmp.ge.s32.totalorder %s16, 4
      %s26 = sphi 0, %s28
      %s29 = sphi 0, %s26
      %s30 = sphi 0, %s29
      %s46 = sphi 0, %s30
      %s50 = sphi 0, %s50
      %s52 = sphi 0, %s50
      %s53 = sphi 0, %s52
      %s67 = sphi 0, %s53
      %s71 = sphi 0, %s71
      %s73 = sphi 0, %s71
      %s74 = sphi 0, %s73
      %s88 = sphi 0, %s74
      %s92 = sphi 0, %s92
      %s94 = sphi 0, %s92
      %s95 = sphi 0, %s94
      %s109 = sphi 0, %s95
      %s113 = sphi 0, %s113
      %s115 = sphi 0, %s113
      %s116 = sphi 0, %s115
      %s130 = sphi 0, %s116
      %s134 = sphi 0, %s134
      %s136 = sphi 0, %s134
      %s137 = sphi 0, %s136
      %s151 = sphi 0, %s137
      %s157 = sphi 0, %s159
      %s160 = sphi 0, %s157
      %s161 = sphi 0, %s160
      %s177 = sphi 0, %s161
    $region4: #{tpu_custom_call.1} parent=1 // loop_header_branch
      %19 = sbr.rel (%p17) target = $region8
    $region5: #{tpu_custom_call.1} parent=1 // loop_body
      %s21 = ssub.s32 %s16, 1
      %s22 = ssub.s32 %s16, 2
      %s23 = sadd.s32 %s16, 1
      %s24 = ssub.s32 %s16, %s23
      %p25 = scmp.eq.s32.totalorder %s24, 0
      %s27 = sadd.s32 %s26, 1
      %s28 = scalar_select %p25, %s26, %s27
      %p31 = pneg %p25
      %p32 = scmp.eq.s32.totalorder %s16, 1
      %p33 = por %p31, %p32
      %p34 = scmp.ne.s32.totalorder %s26, %s29
      %p35 = scmp.eq.s32.totalorder %s16, 0
      %p36 = por %p34, %p35
      %p37 = scmp.ne.s32.totalorder %s26, %s29
      %p38 = scmp.eq.s32.totalorder %s21, 1
      %p39 = por %p37, %p38
      %p40 = scmp.ne.s32.totalorder %s29, %s30
      %p41 = scmp.eq.s32.totalorder %s21, 0
      %p42 = por %p40, %p41
      %p43 = scmp.ne.s32.totalorder %s29, %s30
      %p44 = scmp.eq.s32.totalorder %s22, 1
      %p45 = por %p43, %p44
      %p47 = scmp.ne.s32.totalorder %s30, %s46
      %p48 = scmp.eq.s32.totalorder %s22, 0
      %p49 = por %p47, %p48
      %s51 = sadd.s32 %s50, 1
      %p54 = scmp.eq.s32.totalorder %s16, 1
      %p55 = scmp.ne.s32.totalorder %s50, %s52
      %p56 = scmp.eq.s32.totalorder %s16, 0
      %p57 = por %p55, %p56
      %p58 = scmp.ne.s32.totalorder %s50, %s52
      %p59 = scmp.eq.s32.totalorder %s21, 1
      %p60 = por %p58, %p59
      %p61 = scmp.ne.s32.totalorder %s52, %s53
      %p62 = scmp.eq.s32.totalorder %s21, 0
      %p63 = por %p61, %p62
      %p64 = scmp.ne.s32.totalorder %s52, %s53
      %p65 = scmp.eq.s32.totalorder %s22, 1
      %p66 = por %p64, %p65
      %p68 = scmp.ne.s32.totalorder %s53, %s67
      %p69 = scmp.eq.s32.totalorder %s22, 0
      %p70 = por %p68, %p69
      %s72 = sadd.s32 %s71, 1
      %p75 = scmp.eq.s32.totalorder %s16, 1
      %p76 = scmp.ne.s32.totalorder %s71, %s73
      %p77 = scmp.eq.s32.totalorder %s16, 0
      %p78 = por %p76, %p77
      %p79 = scmp.ne.s32.totalorder %s71, %s73
      %p80 = scmp.eq.s32.totalorder %s21, 1
      %p81 = por %p79, %p80
      %p82 = scmp.ne.s32.totalorder %s73, %s74
      %p83 = scmp.eq.s32.totalorder %s21, 0
      %p84 = por %p82, %p83
      %p85 = scmp.ne.s32.totalorder %s73, %s74
      %p86 = scmp.eq.s32.totalorder %s22, 1
      %p87 = por %p85, %p86
      %p89 = scmp.ne.s32.totalorder %s74, %s88
      %p90 = scmp.eq.s32.totalorder %s22, 0
      %p91 = por %p89, %p90
      %s93 = sadd.s32 %s92, 1
      %p96 = scmp.eq.s32.totalorder %s16, 1
      %p97 = scmp.ne.s32.totalorder %s92, %s94
      %p98 = scmp.eq.s32.totalorder %s16, 0
      %p99 = por %p97, %p98
      %p100 = scmp.ne.s32.totalorder %s92, %s94
      %p101 = scmp.eq.s32.totalorder %s21, 1
      %p102 = por %p100, %p101
      %p103 = scmp.ne.s32.totalorder %s94, %s95
      %p104 = scmp.eq.s32.totalorder %s21, 0
      %p105 = por %p103, %p104
      %p106 = scmp.ne.s32.totalorder %s94, %s95
      %p107 = scmp.eq.s32.totalorder %s22, 1
      %p108 = por %p106, %p107
      %p110 = scmp.ne.s32.totalorder %s95, %s109
      %p111 = scmp.eq.s32.totalorder %s22, 0
      %p112 = por %p110, %p111
      %s114 = sadd.s32 %s113, 1
      %p117 = scmp.eq.s32.totalorder %s16, 1
      %p118 = scmp.ne.s32.totalorder %s113, %s115
      %p119 = scmp.eq.s32.totalorder %s16, 0
      %p120 = por %p118, %p119
      %p121 = scmp.ne.s32.totalorder %s113, %s115
      %p122 = scmp.eq.s32.totalorder %s21, 1
      %p123 = por %p121, %p122
      %p124 = scmp.ne.s32.totalorder %s115, %s116
      %p125 = scmp.eq.s32.totalorder %s21, 0
      %p126 = por %p124, %p125
      %p127 = scmp.ne.s32.totalorder %s115, %s116
      %p128 = scmp.eq.s32.totalorder %s22, 1
      %p129 = por %p127, %p128
      %p131 = scmp.ne.s32.totalorder %s116, %s130
      %p132 = scmp.eq.s32.totalorder %s22, 0
      %p133 = por %p131, %p132
      %s135 = sadd.s32 %s134, 1
      %p138 = scmp.eq.s32.totalorder %s16, 1
      %p139 = scmp.ne.s32.totalorder %s134, %s136
      %p140 = scmp.eq.s32.totalorder %s16, 0
      %p141 = por %p139, %p140
      %p142 = scmp.ne.s32.totalorder %s134, %s136
      %p143 = scmp.eq.s32.totalorder %s21, 1
      %p144 = por %p142, %p143
      %p145 = scmp.ne.s32.totalorder %s136, %s137
      %p146 = scmp.eq.s32.totalorder %s21, 0
      %p147 = por %p145, %p146
      %p148 = scmp.ne.s32.totalorder %s136, %s137
      %p149 = scmp.eq.s32.totalorder %s22, 1
      %p150 = por %p148, %p149
      %p152 = scmp.ne.s32.totalorder %s137, %s151
      %p153 = scmp.eq.s32.totalorder %s22, 0
      %p154 = por %p152, %p153
      %s155 = ssub.s32 %s16, %s23
      %p156 = scmp.eq.s32.totalorder %s155, 0
      %s158 = sadd.s32 %s157, 1
      %s159 = scalar_select %p156, %s157, %s158
      %p162 = pneg %p156
      %p163 = scmp.eq.s32.totalorder %s16, 1
      %p164 = por %p162, %p163
      %p165 = scmp.ne.s32.totalorder %s157, %s160
      %p166 = scmp.eq.s32.totalorder %s16, 0
      %p167 = por %p165, %p166
      %p168 = scmp.ne.s32.totalorder %s157, %s160
      %p169 = scmp.eq.s32.totalorder %s21, 1
      %p170 = por %p168, %p169
      %p171 = scmp.ne.s32.totalorder %s160, %s161
      %p172 = scmp.eq.s32.totalorder %s21, 0
      %p173 = por %p171, %p172
      %p174 = scmp.ne.s32.totalorder %s160, %s161
      %p175 = scmp.eq.s32.totalorder %s22, 1
      %p176 = por %p174, %p175
      %p178 = scmp.ne.s32.totalorder %s161, %s177
      %p179 = scmp.eq.s32.totalorder %s22, 0
      %p180 = por %p178, %p179
      %p181 = scmp.le.s32.totalorder 1, %s16
      %p182 = scmp.lt.s32.totalorder %s16, 3
      %p183 = pnand %p181, %p182
      %p184 = pneg %p183
      // Predicated region
      $region9: #{tpu_custom_call.1} parent=5 // pred_check
        _
      $region10: #{tpu_custom_call.1} parent=5 // pred_check_branch
        %186 = sbr.rel (%p183) target = $region12
      $region11: #{tpu_custom_call.1} parent=5 // pred_region
        %s187 = ssub.s32 %s16, 1
        // Predicated region
        $region13: #{tpu_custom_call.1} parent=11 // pred_check
          %p188 = pneg %p63
        $region14: #{tpu_custom_call.1} parent=11 // pred_check_branch
          %190 = sbr.rel (%p188) target = $region16
        $region15: #{tpu_custom_call.1} parent=11 // pred_region
          _
        $region16: #{tpu_custom_call.1} parent=11 // pred_fallthru
          _
        // Predicated region
        $region17: #{tpu_custom_call.1} parent=11 // pred_check
          %p191 = pneg %p84
        $region18: #{tpu_custom_call.1} parent=11 // pred_check_branch
          %193 = sbr.rel (%p191) target = $region20
        $region19: #{tpu_custom_call.1} parent=11 // pred_region
          _
        $region20: #{tpu_custom_call.1} parent=11 // pred_fallthru
          _
        // Predicated region
        $region21: #{tpu_custom_call.1} parent=11 // pred_check
          %p194 = pneg %p105
        $region22: #{tpu_custom_call.1} parent=11 // pred_check_branch
          %196 = sbr.rel (%p194) target = $region24
        $region23: #{tpu_custom_call.1} parent=11 // pred_region
          %s198 = ssub.s32 16, 16
          %199 = vsyncadd [#allocation4], %s198
          %s201 = sshll.u32 %s3, 4
          %s202 = int_to_ptr.vmem [resolvable:$true] %s201
          %204 = dma.vmem_to_smem %s202, 16, [#allocation2], [#allocation4]
        $region24: #{tpu_custom_call.1} parent=11 // pred_fallthru
          _
        // Predicated region
        $region25: #{tpu_custom_call.1} parent=11 // pred_check
          %p205 = pneg %p126
        $region26: #{tpu_custom_call.1} parent=11 // pred_check_branch
          %207 = sbr.rel (%p205) target = $region28
        $region27: #{tpu_custom_call.1} parent=11 // pred_region
          _
        $region28: #{tpu_custom_call.1} parent=11 // pred_fallthru
          _
        // Predicated region
        $region29: #{tpu_custom_call.1} parent=11 // pred_check
          %p208 = pneg %p147
        $region30: #{tpu_custom_call.1} parent=11 // pred_check_branch
          %210 = sbr.rel (%p208) target = $region32
        $region31: #{tpu_custom_call.1} parent=11 // pred_region
          _
        $region32: #{tpu_custom_call.1} parent=11 // pred_fallthru
          _
      $region12: #{tpu_custom_call.1} parent=5 // pred_fallthru
        _
      %p211 = scmp.lt.s32.totalorder %s16, 2
      // Predicated region
      $region33: #{tpu_custom_call.1} parent=5 // pred_check
        %p212 = pneg %p211
      $region34: #{tpu_custom_call.1} parent=5 // pred_check_branch
        %214 = sbr.rel (%p212) target = $region36
      $region35: #{tpu_custom_call.1} parent=5 // pred_region
        // Predicated region
        $region37: #{tpu_custom_call.1} parent=35 // pred_check
          %p215 = pneg %p36
        $region38: #{tpu_custom_call.1} parent=35 // pred_check_branch
          %217 = sbr.rel (%p215) target = $region40
        $region39: #{tpu_custom_call.1} parent=35 // pred_region
          %p218 = scmp.lt.s32.totalorder %s16, 1
          %s219 = scalar_select %p218, %s16, 1
          %s220 = smul.addr %s219, 8
          %s221 = smul.addr %s220, 8
          %s222 = scalar_lea.vmem %s0, %s221
        $region40: #{tpu_custom_call.1} parent=35 // pred_fallthru
          _
      $region36: #{tpu_custom_call.1} parent=5 // pred_fallthru
        _
      %p223 = scmp.le.s32.totalorder 1, %s16
      %p224 = scmp.lt.s32.totalorder %s16, 3
      %p225 = pnand %p223, %p224
      %p226 = pneg %p225
      // Predicated region
      $region41: #{tpu_custom_call.1} parent=5 // pred_check
        _
      $region42: #{tpu_custom_call.1} parent=5 // pred_check_branch
        %228 = sbr.rel (%p225) target = $region44
      $region43: #{tpu_custom_call.1} parent=5 // pred_region
        %s229 = ssub.s32 %s16, 1
        // Predicated region
        $region45: #{tpu_custom_call.1} parent=43 // pred_check
          %p230 = pneg %p105
        $region46: #{tpu_custom_call.1} parent=43 // pred_check_branch
          %232 = sbr.rel (%p230) target = $region48
        $region47: #{tpu_custom_call.1} parent=43 // pred_region
          %233 = dma.done [#allocation4], 16
        $region48: #{tpu_custom_call.1} parent=43 // pred_fallthru
          _
        %234 = sfence
        %p235 = scmp.lt.s32.totalorder %s21, 1
        %s236 = scalar_select %p235, %s21, 1
        %s237 = smul.addr %s236, 8
        %s238 = smul.addr %s237, 8
        %s239 = scalar_lea.vmem %s0, %s238
        %p240 = pneg %p42
        %p241 = pneg %p39
        %p242 = pneg %p63
        %p243 = pneg %p60
        %p244 = pneg %p84
        %p245 = pneg %p81
        %p246 = pneg %p105
        %p247 = pneg %p102
        %p248 = pneg %p126
        %p249 = pneg %p123
        %p250 = pneg %p147
        %p251 = pneg %p144
        %p252 = pneg %p173
        %p253 = pneg %p170
        %s254 = sand.u32 %s160, 1
        %s255 = scalar_lea.sflag [#allocation3], %s254
        %s256 = sand.u32 %s160, 1
        %s257 = smul.addr %s256, 8
        %s258 = scalar_lea.vmem [#allocation5], %s257
        %p259 = scmp.lt.s32.totalorder %s21, 1
        %s260 = scalar_select %p259, %s21, 1
        %s261 = smul.addr %s260, 8
        %s262 = smul.addr %s261, 8
        %s263 = scalar_lea.vmem %s0, %s262
        %v264 = vld [vmem:[%s263] sm:$0xff]
        %v265 = vld [vmem:[%s263 + $0x8] sm:$0xff]
        %v266 = vld [vmem:[%s263 + $0x10] sm:$0xff]
        %v267 = vld [vmem:[%s263 + $0x18] sm:$0xff]
        %v268 = vld [vmem:[%s263 + $0x20] sm:$0xff]
        %v269 = vld [vmem:[%s263 + $0x28] sm:$0xff]
        %v270 = vld [vmem:[%s263 + $0x30] sm:$0xff]
        %v271 = vld [vmem:[%s263 + $0x38] sm:$0xff]
        %v272 = vld [vmem:[%s1] sm:$0xff]
        %v273 = vld [vmem:[%s1 + $0x8] sm:$0xff]
        %v274 = vld [vmem:[%s1 + $0x10] sm:$0xff]
        %v275 = vld [vmem:[%s1 + $0x18] sm:$0xff]
        %v276 = vld [vmem:[%s1 + $0x20] sm:$0xff]
        %v277 = vld [vmem:[%s1 + $0x28] sm:$0xff]
        %v278 = vld [vmem:[%s1 + $0x30] sm:$0xff]
        %v279 = vld [vmem:[%s1 + $0x38] sm:$0xff]
        %v280 = vld [vmem:[%s1 + $0x40] sm:$0xff]
        %v281 = vld [vmem:[%s1 + $0x48] sm:$0xff]
        %v282 = vld [vmem:[%s1 + $0x50] sm:$0xff]
        %v283 = vld [vmem:[%s1 + $0x58] sm:$0xff]
        %v284 = vld [vmem:[%s1 + $0x60] sm:$0xff]
        %v285 = vld [vmem:[%s1 + $0x68] sm:$0xff]
        %v286 = vld [vmem:[%s1 + $0x70] sm:$0xff]
        %v287 = vld [vmem:[%s1 + $0x78] sm:$0xff]
        %v288 = vld [vmem:[%s1 + $0x80] sm:$0xff]
        %v289 = vld [vmem:[%s1 + $0x88] sm:$0xff]
        %v290 = vld [vmem:[%s1 + $0x90] sm:$0xff]
        %v291 = vld [vmem:[%s1 + $0x98] sm:$0xff]
        %v292 = vld [vmem:[%s1 + $0xa0] sm:$0xff]
        %v293 = vld [vmem:[%s1 + $0xa8] sm:$0xff]
        %v294 = vld [vmem:[%s1 + $0xb0] sm:$0xff]
        %v295 = vld [vmem:[%s1 + $0xb8] sm:$0xff]
        %v296 = vld [vmem:[%s1 + $0xc0] sm:$0xff]
        %v297 = vld [vmem:[%s1 + $0xc8] sm:$0xff]
        %v298 = vld [vmem:[%s1 + $0xd0] sm:$0xff]
        %v299 = vld [vmem:[%s1 + $0xd8] sm:$0xff]
        %v300 = vld [vmem:[%s1 + $0xe0] sm:$0xff]
        %v301 = vld [vmem:[%s1 + $0xe8] sm:$0xff]
        %v302 = vld [vmem:[%s1 + $0xf0] sm:$0xff]
        %v303 = vld [vmem:[%s1 + $0xf8] sm:$0xff]
        %v304 = vld [vmem:[%s1 + $0x100] sm:$0xff]
        %v305 = vld [vmem:[%s1 + $0x108] sm:$0xff]
        %v306 = vld [vmem:[%s1 + $0x110] sm:$0xff]
        %v307 = vld [vmem:[%s1 + $0x118] sm:$0xff]
        %v308 = vld [vmem:[%s1 + $0x120] sm:$0xff]
        %v309 = vld [vmem:[%s1 + $0x128] sm:$0xff]
        %v310 = vld [vmem:[%s1 + $0x130] sm:$0xff]
        %v311 = vld [vmem:[%s1 + $0x138] sm:$0xff]
        %v312 = vld [vmem:[%s1 + $0x140] sm:$0xff]
        %v313 = vld [vmem:[%s1 + $0x148] sm:$0xff]
        %v314 = vld [vmem:[%s1 + $0x150] sm:$0xff]
        %v315 = vld [vmem:[%s1 + $0x158] sm:$0xff]
        %v316 = vld [vmem:[%s1 + $0x160] sm:$0xff]
        %v317 = vld [vmem:[%s1 + $0x168] sm:$0xff]
        %v318 = vld [vmem:[%s1 + $0x170] sm:$0xff]
        %v319 = vld [vmem:[%s1 + $0x178] sm:$0xff]
        %v320 = vld [vmem:[%s1 + $0x180] sm:$0xff]
        %v321 = vld [vmem:[%s1 + $0x188] sm:$0xff]
        %v322 = vld [vmem:[%s1 + $0x190] sm:$0xff]
        %v323 = vld [vmem:[%s1 + $0x198] sm:$0xff]
        %v324 = vld [vmem:[%s1 + $0x1a0] sm:$0xff]
        %v325 = vld [vmem:[%s1 + $0x1a8] sm:$0xff]
        %v326 = vld [vmem:[%s1 + $0x1b0] sm:$0xff]
        %v327 = vld [vmem:[%s1 + $0x1b8] sm:$0xff]
        %v328 = vld [vmem:[%s1 + $0x1c0] sm:$0xff]
        %v329 = vld [vmem:[%s1 + $0x1c8] sm:$0xff]
        %v330 = vld [vmem:[%s1 + $0x1d0] sm:$0xff]
        %v331 = vld [vmem:[%s1 + $0x1d8] sm:$0xff]
        %v332 = vld [vmem:[%s1 + $0x1e0] sm:$0xff]
        %v333 = vld [vmem:[%s1 + $0x1e8] sm:$0xff]
        %v334 = vld [vmem:[%s1 + $0x1f0] sm:$0xff]
        %v335 = vld [vmem:[%s1 + $0x1f8] sm:$0xff]
        %v336 = vld [vmem:[%s1 + $0x200] sm:$0xff]
        %v337 = vld [vmem:[%s1 + $0x208] sm:$0xff]
        %v338 = vld [vmem:[%s1 + $0x210] sm:$0xff]
        %v339 = vld [vmem:[%s1 + $0x218] sm:$0xff]
        %v340 = vld [vmem:[%s1 + $0x220] sm:$0xff]
        %v341 = vld [vmem:[%s1 + $0x228] sm:$0xff]
        %v342 = vld [vmem:[%s1 + $0x230] sm:$0xff]
        %v343 = vld [vmem:[%s1 + $0x238] sm:$0xff]
        %v344 = vld [vmem:[%s1 + $0x240] sm:$0xff]
        %v345 = vld [vmem:[%s1 + $0x248] sm:$0xff]
        %v346 = vld [vmem:[%s1 + $0x250] sm:$0xff]
        %v347 = vld [vmem:[%s1 + $0x258] sm:$0xff]
        %v348 = vld [vmem:[%s1 + $0x260] sm:$0xff]
        %v349 = vld [vmem:[%s1 + $0x268] sm:$0xff]
        %v350 = vld [vmem:[%s1 + $0x270] sm:$0xff]
        %v351 = vld [vmem:[%s1 + $0x278] sm:$0xff]
        %v352 = vld [vmem:[%s1 + $0x280] sm:$0xff]
        %v353 = vld [vmem:[%s1 + $0x288] sm:$0xff]
        %v354 = vld [vmem:[%s1 + $0x290] sm:$0xff]
        %v355 = vld [vmem:[%s1 + $0x298] sm:$0xff]
        %v356 = vld [vmem:[%s1 + $0x2a0] sm:$0xff]
        %v357 = vld [vmem:[%s1 + $0x2a8] sm:$0xff]
        %v358 = vld [vmem:[%s1 + $0x2b0] sm:$0xff]
        %v359 = vld [vmem:[%s1 + $0x2b8] sm:$0xff]
        %v360 = vld [vmem:[%s1 + $0x2c0] sm:$0xff]
        %v361 = vld [vmem:[%s1 + $0x2c8] sm:$0xff]
        %v362 = vld [vmem:[%s1 + $0x2d0] sm:$0xff]
        %v363 = vld [vmem:[%s1 + $0x2d8] sm:$0xff]
        %v364 = vld [vmem:[%s1 + $0x2e0] sm:$0xff]
        %v365 = vld [vmem:[%s1 + $0x2e8] sm:$0xff]
        %v366 = vld [vmem:[%s1 + $0x2f0] sm:$0xff]
        %v367 = vld [vmem:[%s1 + $0x2f8] sm:$0xff]
        %v368 = vld [vmem:[%s1 + $0x300] sm:$0xff]
        %v369 = vld [vmem:[%s1 + $0x308] sm:$0xff]
        %v370 = vld [vmem:[%s1 + $0x310] sm:$0xff]
        %v371 = vld [vmem:[%s1 + $0x318] sm:$0xff]
        %v372 = vld [vmem:[%s1 + $0x320] sm:$0xff]
        %v373 = vld [vmem:[%s1 + $0x328] sm:$0xff]
        %v374 = vld [vmem:[%s1 + $0x330] sm:$0xff]
        %v375 = vld [vmem:[%s1 + $0x338] sm:$0xff]
        %v376 = vld [vmem:[%s1 + $0x340] sm:$0xff]
        %v377 = vld [vmem:[%s1 + $0x348] sm:$0xff]
        %v378 = vld [vmem:[%s1 + $0x350] sm:$0xff]
        %v379 = vld [vmem:[%s1 + $0x358] sm:$0xff]
        %v380 = vld [vmem:[%s1 + $0x360] sm:$0xff]
        %v381 = vld [vmem:[%s1 + $0x368] sm:$0xff]
        %v382 = vld [vmem:[%s1 + $0x370] sm:$0xff]
        %v383 = vld [vmem:[%s1 + $0x378] sm:$0xff]
        %v384 = vld [vmem:[%s1 + $0x380] sm:$0xff]
        %v385 = vld [vmem:[%s1 + $0x388] sm:$0xff]
        %v386 = vld [vmem:[%s1 + $0x390] sm:$0xff]
        %v387 = vld [vmem:[%s1 + $0x398] sm:$0xff]
        %v388 = vld [vmem:[%s1 + $0x3a0] sm:$0xff]
        %v389 = vld [vmem:[%s1 + $0x3a8] sm:$0xff]
        %v390 = vld [vmem:[%s1 + $0x3b0] sm:$0xff]
        %v391 = vld [vmem:[%s1 + $0x3b8] sm:$0xff]
        %v392 = vld [vmem:[%s1 + $0x3c0] sm:$0xff]
        %v393 = vld [vmem:[%s1 + $0x3c8] sm:$0xff]
        %v394 = vld [vmem:[%s1 + $0x3d0] sm:$0xff]
        %v395 = vld [vmem:[%s1 + $0x3d8] sm:$0xff]
        %v396 = vld [vmem:[%s1 + $0x3e0] sm:$0xff]
        %v397 = vld [vmem:[%s1 + $0x3e8] sm:$0xff]
        %v398 = vld [vmem:[%s1 + $0x3f0] sm:$0xff]
        %v399 = vld [vmem:[%s1 + $0x3f8] sm:$0xff]
        %400 = vmatprep.subr.mxu0 0.0
        %401 = vmatpush1.msra.mxu0 %v272
        %402 = vmatprep.subr.mxu0 0.0
        %403 = vmatpush1.msra.mxu0 %v273
        %404 = vmatprep.subr.mxu0 0.0
        %405 = vmatpush1.msra.mxu0 %v274
        %406 = vmatprep.subr.mxu0 0.0
        %407 = vmatpush1.msra.mxu0 %v275
        %408 = vmatprep.subr.mxu0 0.0
        %409 = vmatpush1.msra.mxu0 %v276
        %410 = vmatprep.subr.mxu0 0.0
        %411 = vmatpush1.msra.mxu0 %v277
        %412 = vmatprep.subr.mxu0 0.0
        %413 = vmatpush1.msra.mxu0 %v278
        %414 = vmatprep.subr.mxu0 0.0
        %415 = vmatpush1.msra.mxu0 %v279
        %416 = vmatprep.subr.mxu0 0.0
        %417 = vmatpush1.msra.mxu0 %v280
        %418 = vmatprep.subr.mxu0 0.0
        %419 = vmatpush1.msra.mxu0 %v281
        %420 = vmatprep.subr.mxu0 0.0
        %421 = vmatpush1.msra.mxu0 %v282
        %422 = vmatprep.subr.mxu0 0.0
        %423 = vmatpush1.msra.mxu0 %v283
        %424 = vmatprep.subr.mxu0 0.0
        %425 = vmatpush1.msra.mxu0 %v284
        %426 = vmatprep.subr.mxu0 0.0
        %427 = vmatpush1.msra.mxu0 %v285
        %428 = vmatprep.subr.mxu0 0.0
        %429 = vmatpush1.msra.mxu0 %v286
        %430 = vmatprep.subr.mxu0 0.0
        %431 = vmatpush1.msra.mxu0 %v287
        %432 = vmatprep.subr.mxu0 0.0
        %433 = vmatpush1.msra.mxu0 %v288
        %434 = vmatprep.subr.mxu0 0.0
        %435 = vmatpush1.msra.mxu0 %v289
        %436 = vmatprep.subr.mxu0 0.0
        %437 = vmatpush1.msra.mxu0 %v290
        %438 = vmatprep.subr.mxu0 0.0
        %439 = vmatpush1.msra.mxu0 %v291
        %440 = vmatprep.subr.mxu0 0.0
        %441 = vmatpush1.msra.mxu0 %v292
        %442 = vmatprep.subr.mxu0 0.0
        %443 = vmatpush1.msra.mxu0 %v293
        %444 = vmatprep.subr.mxu0 0.0
        %445 = vmatpush1.msra.mxu0 %v294
        %446 = vmatprep.subr.mxu0 0.0
        %447 = vmatpush1.msra.mxu0 %v295
        %448 = vmatprep.subr.mxu0 0.0
        %449 = vmatpush1.msra.mxu0 %v296
        %450 = vmatprep.subr.mxu0 0.0
        %451 = vmatpush1.msra.mxu0 %v297
        %452 = vmatprep.subr.mxu0 0.0
        %453 = vmatpush1.msra.mxu0 %v298
        %454 = vmatprep.subr.mxu0 0.0
        %455 = vmatpush1.msra.mxu0 %v299
        %456 = vmatprep.subr.mxu0 0.0
        %457 = vmatpush1.msra.mxu0 %v300
        %458 = vmatprep.subr.mxu0 0.0
        %459 = vmatpush1.msra.mxu0 %v301
        %460 = vmatprep.subr.mxu0 0.0
        %461 = vmatpush1.msra.mxu0 %v302
        %462 = vmatprep.subr.mxu0 0.0
        %463 = vmatpush1.msra.mxu0 %v303
        %464 = vmatprep.mubr.f32.mxu0 %v265
        %465 = vmatmul.mubr.f32.gmra.mrb[0].mxu0 %v264
        %v466 = vpop.f32.mrb[0].mxu0
        %v467 = vadd.f32 0.0, %v466
        %v468 = vpop.f32.mrb[0].mxu0
        %469 = vdwg.mxu0
        %470 = vmatprep.subr.mxu0 0.0
        %471 = vmatpush1.msra.mxu0 %v304
        %472 = vmatprep.subr.mxu0 0.0
        %473 = vmatpush1.msra.mxu0 %v305
        %474 = vmatprep.subr.mxu0 0.0
        %475 = vmatpush1.msra.mxu0 %v306
        %476 = vmatprep.subr.mxu0 0.0
        %477 = vmatpush1.msra.mxu0 %v307
        %478 = vmatprep.subr.mxu0 0.0
        %479 = vmatpush1.msra.mxu0 %v308
        %480 = vmatprep.subr.mxu0 0.0
        %481 = vmatpush1.msra.mxu0 %v309
        %482 = vmatprep.subr.mxu0 0.0
        %483 = vmatpush1.msra.mxu0 %v310
        %484 = vmatprep.subr.mxu0 0.0
        %485 = vmatpush1.msra.mxu0 %v311
        %486 = vmatprep.subr.mxu0 0.0
        %487 = vmatpush1.msra.mxu0 %v312
        %488 = vmatprep.subr.mxu0 0.0
        %489 = vmatpush1.msra.mxu0 %v313
        %490 = vmatprep.subr.mxu0 0.0
        %491 = vmatpush1.msra.mxu0 %v314
        %492 = vmatprep.subr.mxu0 0.0
        %493 = vmatpush1.msra.mxu0 %v315
        %494 = vmatprep.subr.mxu0 0.0
        %495 = vmatpush1.msra.mxu0 %v316
        %496 = vmatprep.subr.mxu0 0.0
        %497 = vmatpush1.msra.mxu0 %v317
        %498 = vmatprep.subr.mxu0 0.0
        %499 = vmatpush1.msra.mxu0 %v318
        %500 = vmatprep.subr.mxu0 0.0
        %501 = vmatpush1.msra.mxu0 %v319
        %502 = vmatprep.subr.mxu0 0.0
        %503 = vmatpush1.msra.mxu0 %v320
        %504 = vmatprep.subr.mxu0 0.0
        %505 = vmatpush1.msra.mxu0 %v321
        %506 = vmatprep.subr.mxu0 0.0
        %507 = vmatpush1.msra.mxu0 %v322
        %508 = vmatprep.subr.mxu0 0.0
        %509 = vmatpush1.msra.mxu0 %v323
        %510 = vmatprep.subr.mxu0 0.0
        %511 = vmatpush1.msra.mxu0 %v324
        %512 = vmatprep.subr.mxu0 0.0
        %513 = vmatpush1.msra.mxu0 %v325
        %514 = vmatprep.subr.mxu0 0.0
        %515 = vmatpush1.msra.mxu0 %v326
        %516 = vmatprep.subr.mxu0 0.0
        %517 = vmatpush1.msra.mxu0 %v327
        %518 = vmatprep.subr.mxu0 0.0
        %519 = vmatpush1.msra.mxu0 %v328
        %520 = vmatprep.subr.mxu0 0.0
        %521 = vmatpush1.msra.mxu0 %v329
        %522 = vmatprep.subr.mxu0 0.0
        %523 = vmatpush1.msra.mxu0 %v330
        %524 = vmatprep.subr.mxu0 0.0
        %525 = vmatpush1.msra.mxu0 %v331
        %526 = vmatprep.subr.mxu0 0.0
        %527 = vmatpush1.msra.mxu0 %v332
        %528 = vmatprep.subr.mxu0 0.0
        %529 = vmatpush1.msra.mxu0 %v333
        %530 = vmatprep.subr.mxu0 0.0
        %531 = vmatpush1.msra.mxu0 %v334
        %532 = vmatprep.subr.mxu0 0.0
        %533 = vmatpush1.msra.mxu0 %v335
        %534 = vmatprep.mubr.f32.mxu0 %v267
        %535 = vmatmul.mubr.f32.gmra.mrb[0].mxu0 %v266
        %v536 = vpop.f32.mrb[0].mxu0
        %v537 = vadd.f32 %v467, %v536
        %v538 = vpop.f32.mrb[0].mxu0
        %539 = vdwg.mxu0
        %540 = vmatprep.subr.mxu0 0.0
        %541 = vmatpush1.msra.mxu0 %v336
        %542 = vmatprep.subr.mxu0 0.0
        %543 = vmatpush1.msra.mxu0 %v337
        %544 = vmatprep.subr.mxu0 0.0
        %545 = vmatpush1.msra.mxu0 %v338
        %546 = vmatprep.subr.mxu0 0.0
        %547 = vmatpush1.msra.mxu0 %v339
        %548 = vmatprep.subr.mxu0 0.0
        %549 = vmatpush1.msra.mxu0 %v340
        %550 = vmatprep.subr.mxu0 0.0
        %551 = vmatpush1.msra.mxu0 %v341
        %552 = vmatprep.subr.mxu0 0.0
        %553 = vmatpush1.msra.mxu0 %v342
        %554 = vmatprep.subr.mxu0 0.0
        %555 = vmatpush1.msra.mxu0 %v343
        %556 = vmatprep.subr.mxu0 0.0
        %557 = vmatpush1.msra.mxu0 %v344
        %558 = vmatprep.subr.mxu0 0.0
        %559 = vmatpush1.msra.mxu0 %v345
        %560 = vmatprep.subr.mxu0 0.0
        %561 = vmatpush1.msra.mxu0 %v346
        %562 = vmatprep.subr.mxu0 0.0
        %563 = vmatpush1.msra.mxu0 %v347
        %564 = vmatprep.subr.mxu0 0.0
        %565 = vmatpush1.msra.mxu0 %v348
        %566 = vmatprep.subr.mxu0 0.0
        %567 = vmatpush1.msra.mxu0 %v349
        %568 = vmatprep.subr.mxu0 0.0
        %569 = vmatpush1.msra.mxu0 %v350
        %570 = vmatprep.subr.mxu0 0.0
        %571 = vmatpush1.msra.mxu0 %v351
        %572 = vmatprep.subr.mxu0 0.0
        %573 = vmatpush1.msra.mxu0 %v352
        %574 = vmatprep.subr.mxu0 0.0
        %575 = vmatpush1.msra.mxu0 %v353
        %576 = vmatprep.subr.mxu0 0.0
        %577 = vmatpush1.msra.mxu0 %v354
        %578 = vmatprep.subr.mxu0 0.0
        %579 = vmatpush1.msra.mxu0 %v355
        %580 = vmatprep.subr.mxu0 0.0
        %581 = vmatpush1.msra.mxu0 %v356
        %582 = vmatprep.subr.mxu0 0.0
        %583 = vmatpush1.msra.mxu0 %v357
        %584 = vmatprep.subr.mxu0 0.0
        %585 = vmatpush1.msra.mxu0 %v358
        %586 = vmatprep.subr.mxu0 0.0
        %587 = vmatpush1.msra.mxu0 %v359
        %588 = vmatprep.subr.mxu0 0.0
        %589 = vmatpush1.msra.mxu0 %v360
        %590 = vmatprep.subr.mxu0 0.0
        %591 = vmatpush1.msra.mxu0 %v361
        %592 = vmatprep.subr.mxu0 0.0
        %593 = vmatpush1.msra.mxu0 %v362
        %594 = vmatprep.subr.mxu0 0.0
        %595 = vmatpush1.msra.mxu0 %v363
        %596 = vmatprep.subr.mxu0 0.0
        %597 = vmatpush1.msra.mxu0 %v364
        %598 = vmatprep.subr.mxu0 0.0
        %599 = vmatpush1.msra.mxu0 %v365
        %600 = vmatprep.subr.mxu0 0.0
        %601 = vmatpush1.msra.mxu0 %v366
        %602 = vmatprep.subr.mxu0 0.0
        %603 = vmatpush1.msra.mxu0 %v367
        %604 = vmatprep.mubr.f32.mxu0 %v269
        %605 = vmatmul.mubr.f32.gmra.mrb[0].mxu0 %v268
        %v606 = vpop.f32.mrb[0].mxu0
        %v607 = vadd.f32 %v537, %v606
        %v608 = vpop.f32.mrb[0].mxu0
        %609 = vdwg.mxu0
        %610 = vmatprep.subr.mxu0 0.0
        %611 = vmatpush1.msra.mxu0 %v368
        %612 = vmatprep.subr.mxu0 0.0
        %613 = vmatpush1.msra.mxu0 %v369
        %614 = vmatprep.subr.mxu0 0.0
        %615 = vmatpush1.msra.mxu0 %v370
        %616 = vmatprep.subr.mxu0 0.0
        %617 = vmatpush1.msra.mxu0 %v371
        %618 = vmatprep.subr.mxu0 0.0
        %619 = vmatpush1.msra.mxu0 %v372
        %620 = vmatprep.subr.mxu0 0.0
        %621 = vmatpush1.msra.mxu0 %v373
        %622 = vmatprep.subr.mxu0 0.0
        %623 = vmatpush1.msra.mxu0 %v374
        %624 = vmatprep.subr.mxu0 0.0
        %625 = vmatpush1.msra.mxu0 %v375
        %626 = vmatprep.subr.mxu0 0.0
        %627 = vmatpush1.msra.mxu0 %v376
        %628 = vmatprep.subr.mxu0 0.0
        %629 = vmatpush1.msra.mxu0 %v377
        %630 = vmatprep.subr.mxu0 0.0
        %631 = vmatpush1.msra.mxu0 %v378
        %632 = vmatprep.subr.mxu0 0.0
        %633 = vmatpush1.msra.mxu0 %v379
        %634 = vmatprep.subr.mxu0 0.0
        %635 = vmatpush1.msra.mxu0 %v380
        %636 = vmatprep.subr.mxu0 0.0
        %637 = vmatpush1.msra.mxu0 %v381
        %638 = vmatprep.subr.mxu0 0.0
        %639 = vmatpush1.msra.mxu0 %v382
        %640 = vmatprep.subr.mxu0 0.0
        %641 = vmatpush1.msra.mxu0 %v383
        %642 = vmatprep.subr.mxu0 0.0
        %643 = vmatpush1.msra.mxu0 %v384
        %644 = vmatprep.subr.mxu0 0.0
        %645 = vmatpush1.msra.mxu0 %v385
        %646 = vmatprep.subr.mxu0 0.0
        %647 = vmatpush1.msra.mxu0 %v386
        %648 = vmatprep.subr.mxu0 0.0
        %649 = vmatpush1.msra.mxu0 %v387
        %650 = vmatprep.subr.mxu0 0.0
        %651 = vmatpush1.msra.mxu0 %v388
        %652 = vmatprep.subr.mxu0 0.0
        %653 = vmatpush1.msra.mxu0 %v389
        %654 = vmatprep.subr.mxu0 0.0
        %655 = vmatpush1.msra.mxu0 %v390
        %656 = vmatprep.subr.mxu0 0.0
        %657 = vmatpush1.msra.mxu0 %v391
        %658 = vmatprep.subr.mxu0 0.0
        %659 = vmatpush1.msra.mxu0 %v392
        %660 = vmatprep.subr.mxu0 0.0
        %661 = vmatpush1.msra.mxu0 %v393
        %662 = vmatprep.subr.mxu0 0.0
        %663 = vmatpush1.msra.mxu0 %v394
        %664 = vmatprep.subr.mxu0 0.0
        %665 = vmatpush1.msra.mxu0 %v395
        %666 = vmatprep.subr.mxu0 0.0
        %667 = vmatpush1.msra.mxu0 %v396
        %668 = vmatprep.subr.mxu0 0.0
        %669 = vmatpush1.msra.mxu0 %v397
        %670 = vmatprep.subr.mxu0 0.0
        %671 = vmatpush1.msra.mxu0 %v398
        %672 = vmatprep.subr.mxu0 0.0
        %673 = vmatpush1.msra.mxu0 %v399
        %674 = vmatprep.mubr.f32.mxu0 %v271
        %675 = vmatmul.mubr.f32.gmra.mrb[0].mxu0 %v270
        %v676 = vpop.f32.mrb[0].mxu0
        %v677 = vadd.f32 %v607, %v676
        %v678 = vpop.f32.mrb[0].mxu0
        %679 = vdwg.mxu0
        %680 = vxpose.xlu0.b32.start [1/16] %v677, 128
        %681 = vxpose.xlu0.b32.cont [2/16] 0.0, 128
        %682 = vxpose.xlu0.b32.cont [3/16] 0.0, 128
        %683 = vxpose.xlu0.b32.cont [4/16] 0.0, 128
        %684 = vxpose.xlu0.b32.cont [5/16] 0.0, 128
        %685 = vxpose.xlu0.b32.cont [6/16] 0.0, 128
        %686 = vxpose.xlu0.b32.cont [7/16] 0.0, 128
        %687 = vxpose.xlu0.b32.cont [8/16] 0.0, 128
        %688 = vxpose.xlu0.b32.cont [9/16] 0.0, 128
        %689 = vxpose.xlu0.b32.cont [10/16] 0.0, 128
        %690 = vxpose.xlu0.b32.cont [11/16] 0.0, 128
        %691 = vxpose.xlu0.b32.cont [12/16] 0.0, 128
        %692 = vxpose.xlu0.b32.cont [13/16] 0.0, 128
        %693 = vxpose.xlu0.b32.cont [14/16] 0.0, 128
        %694 = vxpose.xlu0.b32.cont [15/16] 0.0, 128
        %695 = vxpose.xlu0.b32.end [16/16] 0.0, 128
        %v696 = vpop.trf.xlu0
        %v697 = vpop.trf.xlu0
        %v698 = vpop.trf.xlu0
        %v699 = vpop.trf.xlu0
        %v700 = vpop.trf.xlu0
        %v701 = vpop.trf.xlu0
        %v702 = vpop.trf.xlu0
        %v703 = vpop.trf.xlu0
        %v704 = vpop.trf.xlu0
        %v705 = vpop.trf.xlu0
        %v706 = vpop.trf.xlu0
        %v707 = vpop.trf.xlu0
        %v708 = vpop.trf.xlu0
        %v709 = vpop.trf.xlu0
        %v710 = vpop.trf.xlu0
        %v711 = vpop.trf.xlu0
        %v712 = vld [vmem:[%s2] sm:$0xff]
        %v713 = vld [vmem:[%s2 + $0x8] sm:$0xff]
        %v714 = vld [vmem:[%s2 + $0x10] sm:$0xff]
        %v715 = vld [vmem:[%s2 + $0x18] sm:$0xff]
        %v716 = vld [vmem:[%s2 + $0x20] sm:$0xff]
        %v717 = vld [vmem:[%s2 + $0x28] sm:$0xff]
        %v718 = vld [vmem:[%s2 + $0x30] sm:$0xff]
        %v719 = vld [vmem:[%s2 + $0x38] sm:$0xff]
        %721 = vset.pattern.permute.xlu0 0
        %722 = vperm.xlu0 %721, %v712
        %v723 = vpop.permute.xlu0 %722
        %726 = vset.pattern.permute.xlu0 0
        %727 = vperm.xlu0 %726, %v713
        %v728 = vpop.permute.xlu0 %727
        %731 = vset.pattern.permute.xlu0 0
        %732 = vperm.xlu0 %731, %v714
        %v733 = vpop.permute.xlu0 %732
        %736 = vset.pattern.permute.xlu0 0
        %737 = vperm.xlu0 %736, %v715
        %v738 = vpop.permute.xlu0 %737
        %741 = vset.pattern.permute.xlu0 0
        %742 = vperm.xlu0 %741, %v716
        %v743 = vpop.permute.xlu0 %742
        %746 = vset.pattern.permute.xlu0 0
        %747 = vperm.xlu0 %746, %v717
        %v748 = vpop.permute.xlu0 %747
        %751 = vset.pattern.permute.xlu0 0
        %752 = vperm.xlu0 %751, %v718
        %v753 = vpop.permute.xlu0 %752
        %756 = vset.pattern.permute.xlu0 0
        %757 = vperm.xlu0 %756, %v719
        %v758 = vpop.permute.xlu0 %757
        %v760 = vadd.f32 %v696, %v723
        %v761 = vadd.f32 %v697, %v728
        %v762 = vadd.f32 %v698, %v733
        %v763 = vadd.f32 %v699, %v738
        %v764 = vadd.f32 %v700, %v743
        %v765 = vadd.f32 %v701, %v748
        %v766 = vadd.f32 %v702, %v753
        %v767 = vadd.f32 %v703, %v758
        %s768 = sld [smem:[#allocation2]]
        %s769 = sld [smem:[#allocation2 + $0x1]]
        %s770 = sld [smem:[#allocation2 + $0x2]]
        %s771 = sld [smem:[#allocation2 + $0x3]]
        %v772 = vstv %s768
        %v773 = vmul.f32 %v772, 0.0
        %v774 = vadd.f32 %v760, %v773
        %v775 = vxor.u32 %v774, 2147483648
        %v776 = vmul.f32 %v775, 1.442695
        %v777 = vpow.pop %v776
        %v778 = vadd.f32 %v777, 1.0
        %v779 = vrcp.pop %v778
        %v780 = vmul.f32 1.0, %v779
        %v781 = vstv %s769
        %v782 = vmul.f32 %v781, 0.0
        %v783 = vadd.f32 %v760, %v782
        %v784 = vxor.u32 %v783, 2147483648
        %v785 = vmul.f32 %v784, 1.442695
        %v786 = vpow.pop %v785
        %v787 = vadd.f32 %v786, 1.0
        %v788 = vrcp.pop %v787
        %v789 = vmul.f32 1.0, %v788
        %v790 = vstv %s770
        %v791 = vmul.f32 %v790, 0.0
        %v792 = vadd.f32 %v760, %v791
        %v793 = vtanh.pop %v792
        %v794 = vstv %s771
        %v795 = vmul.f32 %v794, 0.0
        %v796 = vadd.f32 %v760, %v795
        %v797 = vxor.u32 %v796, 2147483648
        %v798 = vmul.f32 %v797, 1.442695
        %v799 = vpow.pop %v798
        %v800 = vadd.f32 %v799, 1.0
        %v801 = vrcp.pop %v800
        %v802 = vmul.f32 1.0, %v801
        %v803 = vmul.f32 %v789, 0.0
        %v805 = vrot.slane %v793, 2
        %v807 = vmul.f32 %v780, %v805
        %v809 = vrot.slane %v807, 7
        %v811 = vadd.f32 %v803, %v809
        %v812 = vtanh.pop %v811
        %v814 = vrot.slane %v812, 6
        %v816 = vmul.f32 %v802, %v814
        %v817 = vmul.f32 %v772, %v816
        %v819 = vrot.slane %v817, 3
        %v821 = vadd.f32 %v761, %v819
        %v822 = vxor.u32 %v821, 2147483648
        %v823 = vmul.f32 %v822, 1.442695
        %v824 = vpow.pop %v823
        %v825 = vadd.f32 %v824, 1.0
        %v826 = vrcp.pop %v825
        %v827 = vmul.f32 1.0, %v826
        %v828 = vmul.f32 %v781, %v816
        %v830 = vrot.slane %v828, 2
        %v832 = vadd.f32 %v761, %v830
        %v833 = vxor.u32 %v832, 2147483648
        %v834 = vmul.f32 %v833, 1.442695
        %v835 = vpow.pop %v834
        %v836 = vadd.f32 %v835, 1.0
        %v837 = vrcp.pop %v836
        %v838 = vmul.f32 1.0, %v837
        %v839 = vmul.f32 %v790, %v816
        %v841 = vrot.slane %v839, 1
        %v843 = vadd.f32 %v761, %v841
        %v844 = vtanh.pop %v843
        %v845 = vmul.f32 %v794, %v816
        %v846 = vadd.f32 %v761, %v845
        %v847 = vxor.u32 %v846, 2147483648
        %v848 = vmul.f32 %v847, 1.442695
        %v849 = vpow.pop %v848
        %v850 = vadd.f32 %v849, 1.0
        %v851 = vrcp.pop %v850
        %v852 = vmul.f32 1.0, %v851
        %v853 = vmul.f32 %v838, %v811
        %v855 = vrot.slane %v844, 2
        %v857 = vmul.f32 %v827, %v855
        %v859 = vrot.slane %v857, 7
        %v861 = vadd.f32 %v853, %v859
        %v862 = vtanh.pop %v861
        %v864 = vrot.slane %v862, 6
        %v866 = vmul.f32 %v852, %v864
        %v867 = vmul.f32 %v772, %v866
        %v869 = vrot.slane %v867, 3
        %v871 = vadd.f32 %v762, %v869
        %v872 = vxor.u32 %v871, 2147483648
        %v873 = vmul.f32 %v872, 1.442695
        %v874 = vpow.pop %v873
        %v875 = vadd.f32 %v874, 1.0
        %v876 = vrcp.pop %v875
        %v877 = vmul.f32 1.0, %v876
        %v878 = vmul.f32 %v781, %v866
        %v880 = vrot.slane %v878, 2
        %v882 = vadd.f32 %v762, %v880
        %v883 = vxor.u32 %v882, 2147483648
        %v884 = vmul.f32 %v883, 1.442695
        %v885 = vpow.pop %v884
        %v886 = vadd.f32 %v885, 1.0
        %v887 = vrcp.pop %v886
        %v888 = vmul.f32 1.0, %v887
        %v889 = vmul.f32 %v790, %v866
        %v891 = vrot.slane %v889, 1
        %v893 = vadd.f32 %v762, %v891
        %v894 = vtanh.pop %v893
        %v895 = vmul.f32 %v794, %v866
        %v896 = vadd.f32 %v762, %v895
        %v897 = vxor.u32 %v896, 2147483648
        %v898 = vmul.f32 %v897, 1.442695
        %v899 = vpow.pop %v898
        %v900 = vadd.f32 %v899, 1.0
        %v901 = vrcp.pop %v900
        %v902 = vmul.f32 1.0, %v901
        %v903 = vmul.f32 %v888, %v861
        %v905 = vrot.slane %v894, 2
        %v907 = vmul.f32 %v877, %v905
        %v909 = vrot.slane %v907, 7
        %v911 = vadd.f32 %v903, %v909
        %v912 = vtanh.pop %v911
        %v914 = vrot.slane %v912, 6
        %v916 = vmul.f32 %v902, %v914
        %v917 = vmul.f32 %v772, %v916
        %v919 = vrot.slane %v917, 3
        %v921 = vadd.f32 %v763, %v919
        %v922 = vxor.u32 %v921, 2147483648
        %v923 = vmul.f32 %v922, 1.442695
        %v924 = vpow.pop %v923
        %v925 = vadd.f32 %v924, 1.0
        %v926 = vrcp.pop %v925
        %v927 = vmul.f32 1.0, %v926
        %v928 = vmul.f32 %v781, %v916
        %v930 = vrot.slane %v928, 2
        %v932 = vadd.f32 %v763, %v930
        %v933 = vxor.u32 %v932, 2147483648
        %v934 = vmul.f32 %v933, 1.442695
        %v935 = vpow.pop %v934
        %v936 = vadd.f32 %v935, 1.0
        %v937 = vrcp.pop %v936
        %v938 = vmul.f32 1.0, %v937
        %v939 = vmul.f32 %v790, %v916
        %v941 = vrot.slane %v939, 1
        %v943 = vadd.f32 %v763, %v941
        %v944 = vtanh.pop %v943
        %v945 = vmul.f32 %v794, %v916
        %v946 = vadd.f32 %v763, %v945
        %v947 = vxor.u32 %v946, 2147483648
        %v948 = vmul.f32 %v947, 1.442695
        %v949 = vpow.pop %v948
        %v950 = vadd.f32 %v949, 1.0
        %v951 = vrcp.pop %v950
        %v952 = vmul.f32 1.0, %v951
        %v953 = vmul.f32 %v938, %v911
        %v955 = vrot.slane %v944, 2
        %v957 = vmul.f32 %v927, %v955
        %v959 = vrot.slane %v957, 7
        %v961 = vadd.f32 %v953, %v959
        %v962 = vtanh.pop %v961
        %v964 = vrot.slane %v962, 6
        %v966 = vmul.f32 %v952, %v964
        %v967 = vmul.f32 %v772, %v966
        %v969 = vrot.slane %v967, 3
        %v971 = vadd.f32 %v764, %v969
        %v972 = vxor.u32 %v971, 2147483648
        %v973 = vmul.f32 %v972, 1.442695
        %v974 = vpow.pop %v973
        %v975 = vadd.f32 %v974, 1.0
        %v976 = vrcp.pop %v975
        %v977 = vmul.f32 1.0, %v976
        %v978 = vmul.f32 %v781, %v966
        %v980 = vrot.slane %v978, 2
        %v982 = vadd.f32 %v764, %v980
        %v983 = vxor.u32 %v982, 2147483648
        %v984 = vmul.f32 %v983, 1.442695
        %v985 = vpow.pop %v984
        %v986 = vadd.f32 %v985, 1.0
        %v987 = vrcp.pop %v986
        %v988 = vmul.f32 1.0, %v987
        %v989 = vmul.f32 %v790, %v966
        %v991 = vrot.slane %v989, 1
        %v993 = vadd.f32 %v764, %v991
        %v994 = vtanh.pop %v993
        %v995 = vmul.f32 %v794, %v966
        %v996 = vadd.f32 %v764, %v995
        %v997 = vxor.u32 %v996, 2147483648
        %v998 = vmul.f32 %v997, 1.442695
        %v999 = vpow.pop %v998
        %v1000 = vadd.f32 %v999, 1.0
        %v1001 = vrcp.pop %v1000
        %v1002 = vmul.f32 1.0, %v1001
        %v1003 = vmul.f32 %v988, %v961
        %v1005 = vrot.slane %v994, 2
        %v1007 = vmul.f32 %v977, %v1005
        %v1009 = vrot.slane %v1007, 7
        %v1011 = vadd.f32 %v1003, %v1009
        %v1012 = vtanh.pop %v1011
        %v1014 = vrot.slane %v1012, 6
        %v1016 = vmul.f32 %v1002, %v1014
        %v1017 = vmul.f32 %v772, %v1016
        %v1019 = vrot.slane %v1017, 3
        %v1021 = vadd.f32 %v765, %v1019
        %v1022 = vxor.u32 %v1021, 2147483648
        %v1023 = vmul.f32 %v1022, 1.442695
        %v1024 = vpow.pop %v1023
        %v1025 = vadd.f32 %v1024, 1.0
        %v1026 = vrcp.pop %v1025
        %v1027 = vmul.f32 1.0, %v1026
        %v1028 = vmul.f32 %v781, %v1016
        %v1030 = vrot.slane %v1028, 2
        %v1032 = vadd.f32 %v765, %v1030
        %v1033 = vxor.u32 %v1032, 2147483648
        %v1034 = vmul.f32 %v1033, 1.442695
        %v1035 = vpow.pop %v1034
        %v1036 = vadd.f32 %v1035, 1.0
        %v1037 = vrcp.pop %v1036
        %v1038 = vmul.f32 1.0, %v1037
        %v1039 = vmul.f32 %v790, %v1016
        %v1041 = vrot.slane %v1039, 1
        %v1043 = vadd.f32 %v765, %v1041
        %v1044 = vtanh.pop %v1043
        %v1045 = vmul.f32 %v794, %v1016
        %v1046 = vadd.f32 %v765, %v1045
        %v1047 = vxor.u32 %v1046, 2147483648
        %v1048 = vmul.f32 %v1047, 1.442695
        %v1049 = vpow.pop %v1048
        %v1050 = vadd.f32 %v1049, 1.0
        %v1051 = vrcp.pop %v1050
        %v1052 = vmul.f32 1.0, %v1051
        %v1053 = vmul.f32 %v1038, %v1011
        %v1055 = vrot.slane %v1044, 2
        %v1057 = vmul.f32 %v1027, %v1055
        %v1059 = vrot.slane %v1057, 7
        %v1061 = vadd.f32 %v1053, %v1059
        %v1062 = vtanh.pop %v1061
        %v1064 = vrot.slane %v1062, 6
        %v1066 = vmul.f32 %v1052, %v1064
        %v1067 = vmul.f32 %v772, %v1066
        %v1069 = vrot.slane %v1067, 3
        %v1071 = vadd.f32 %v766, %v1069
        %v1072 = vxor.u32 %v1071, 2147483648
        %v1073 = vmul.f32 %v1072, 1.442695
        %v1074 = vpow.pop %v1073
        %v1075 = vadd.f32 %v1074, 1.0
        %v1076 = vrcp.pop %v1075
        %v1077 = vmul.f32 1.0, %v1076
        %v1078 = vmul.f32 %v781, %v1066
        %v1080 = vrot.slane %v1078, 2
        %v1082 = vadd.f32 %v766, %v1080
        %v1083 = vxor.u32 %v1082, 2147483648
        %v1084 = vmul.f32 %v1083, 1.442695
        %v1085 = vpow.pop %v1084
        %v1086 = vadd.f32 %v1085, 1.0
        %v1087 = vrcp.pop %v1086
        %v1088 = vmul.f32 1.0, %v1087
        %v1089 = vmul.f32 %v790, %v1066
        %v1091 = vrot.slane %v1089, 1
        %v1093 = vadd.f32 %v766, %v1091
        %v1094 = vtanh.pop %v1093
        %v1095 = vmul.f32 %v794, %v1066
        %v1096 = vadd.f32 %v766, %v1095
        %v1097 = vxor.u32 %v1096, 2147483648
        %v1098 = vmul.f32 %v1097, 1.442695
        %v1099 = vpow.pop %v1098
        %v1100 = vadd.f32 %v1099, 1.0
        %v1101 = vrcp.pop %v1100
        %v1102 = vmul.f32 1.0, %v1101
        %v1103 = vmul.f32 %v1088, %v1061
        %v1105 = vrot.slane %v1094, 2
        %v1107 = vmul.f32 %v1077, %v1105
        %v1109 = vrot.slane %v1107, 7
        %v1111 = vadd.f32 %v1103, %v1109
        %v1112 = vtanh.pop %v1111
        %v1114 = vrot.slane %v1112, 6
        %v1116 = vmul.f32 %v1102, %v1114
        %v1117 = vmul.f32 %v772, %v1116
        %v1119 = vrot.slane %v1117, 3
        %v1121 = vadd.f32 %v767, %v1119
        %v1122 = vxor.u32 %v1121, 2147483648
        %v1123 = vmul.f32 %v1122, 1.442695
        %v1124 = vpow.pop %v1123
        %v1125 = vadd.f32 %v1124, 1.0
        %v1126 = vrcp.pop %v1125
        %v1127 = vmul.f32 1.0, %v1126
        %v1128 = vmul.f32 %v781, %v1116
        %v1130 = vrot.slane %v1128, 2
        %v1132 = vadd.f32 %v767, %v1130
        %v1133 = vxor.u32 %v1132, 2147483648
        %v1134 = vmul.f32 %v1133, 1.442695
        %v1135 = vpow.pop %v1134
        %v1136 = vadd.f32 %v1135, 1.0
        %v1137 = vrcp.pop %v1136
        %v1138 = vmul.f32 1.0, %v1137
        %v1139 = vmul.f32 %v790, %v1116
        %v1141 = vrot.slane %v1139, 1
        %v1143 = vadd.f32 %v767, %v1141
        %v1144 = vtanh.pop %v1143
        %v1145 = vmul.f32 %v794, %v1116
        %v1146 = vadd.f32 %v767, %v1145
        %v1147 = vxor.u32 %v1146, 2147483648
        %v1148 = vmul.f32 %v1147, 1.442695
        %v1149 = vpow.pop %v1148
        %v1150 = vadd.f32 %v1149, 1.0
        %v1151 = vrcp.pop %v1150
        %v1152 = vmul.f32 1.0, %v1151
        %v1153 = vmul.f32 %v1138, %v1111
        %v1155 = vrot.slane %v1144, 2
        %v1157 = vmul.f32 %v1127, %v1155
        %v1159 = vrot.slane %v1157, 7
        %v1161 = vadd.f32 %v1153, %v1159
        %v1162 = vtanh.pop %v1161
        %v1164 = vrot.slane %v1162, 6
        %v1166 = vmul.f32 %v1152, %v1164
        %v1168 = vrot.slane %v816, 3
        %v1171 = vrot.slane %v866, 2
        %v1174 = vrot.slane %v916, 1
        %v1177 = vrot.slane %v1016, 7
        %v1180 = vrot.slane %v1066, 6
        %v1183 = vrot.slane %v1116, 5
        %v1186 = vrot.slane %v1166, 4
        %vm1188 = vcmask 1040384
        %v1189 = vsel %vm1188, %v1168, %v1171
        %vm1190 = vcmask 1041408
        %v1191 = vsel %vm1190, %v1189, %v1174
        %vm1192 = vcmask 1042432
        %v1193 = vsel %vm1192, %v1191, %v966
        %vm1194 = vcmask 1043456
        %v1195 = vsel %vm1194, %v1193, %v1177
        %vm1196 = vcmask 1044480
        %v1197 = vsel %vm1196, %v1195, %v1180
        %vm1198 = vcmask 1045504
        %v1199 = vsel %vm1198, %v1197, %v1183
        %vm1200 = vcmask 1046528
        %v1201 = vsel %vm1200, %v1199, %v1186
        %v1202 = vxor.u32 %v1201, 2147483648
        %v1203 = vmul.f32 %v1202, 1.442695
        %v1204 = vpow.pop %v1203
        %v1205 = vadd.f32 %v1204, 1.0
        %v1206 = vrcp.pop %v1205
        %v1207 = vmul.f32 1.0, %v1206
        %1208 = vxpose.xlu0.b32.start [1/16] %v1207, 128
        %1209 = vxpose.xlu0.b32.cont [2/16] 0.0, 128
        %1210 = vxpose.xlu0.b32.cont [3/16] 0.0, 128
        %1211 = vxpose.xlu0.b32.cont [4/16] 0.0, 128
        %1212 = vxpose.xlu0.b32.cont [5/16] 0.0, 128
        %1213 = vxpose.xlu0.b32.cont [6/16] 0.0, 128
        %1214 = vxpose.xlu0.b32.cont [7/16] 0.0, 128
        %1215 = vxpose.xlu0.b32.cont [8/16] 0.0, 128
        %1216 = vxpose.xlu0.b32.cont [9/16] 0.0, 128
        %1217 = vxpose.xlu0.b32.cont [10/16] 0.0, 128
        %1218 = vxpose.xlu0.b32.cont [11/16] 0.0, 128
        %1219 = vxpose.xlu0.b32.cont [12/16] 0.0, 128
        %1220 = vxpose.xlu0.b32.cont [13/16] 0.0, 128
        %1221 = vxpose.xlu0.b32.cont [14/16] 0.0, 128
        %1222 = vxpose.xlu0.b32.cont [15/16] 0.0, 128
        %1223 = vxpose.xlu0.b32.end [16/16] 0.0, 128
        %v1224 = vpop.trf.xlu0
        %v1225 = vpop.trf.xlu0
        %v1226 = vpop.trf.xlu0
        %v1227 = vpop.trf.xlu0
        %v1228 = vpop.trf.xlu0
        %v1229 = vpop.trf.xlu0
        %v1230 = vpop.trf.xlu0
        %v1231 = vpop.trf.xlu0
        %v1232 = vpop.trf.xlu0
        %v1233 = vpop.trf.xlu0
        %v1234 = vpop.trf.xlu0
        %v1235 = vpop.trf.xlu0
        %v1236 = vpop.trf.xlu0
        %v1237 = vpop.trf.xlu0
        %v1238 = vpop.trf.xlu0
        %v1239 = vpop.trf.xlu0
        %vm1240 = vcmask 64512
        %v1241 = vsel %vm1240, %v1224, 0.0
        %1242 = vadd.xlane.f32.xlu0 %v1241
        %v1243 = vpop.xlane.xlu0 %1242
        %1245 = vset.pattern.permute.xlu0 0
        %1246 = vperm.xlu0 %1245, %v1224
        %v1247 = vpop.permute.xlu0 %1246
        %v1249 = vmul.f32 %v264, %v1247
        %1250 = vset.pattern.permute.xlu0 1
        %1251 = vperm.xlu0 %1250, %v1224
        %v1252 = vpop.permute.xlu0 %1251
        %v1254 = vmul.f32 %v265, %v1252
        %v1255 = vadd.f32 %v1249, %v1254
        %1256 = vset.pattern.permute.xlu0 2
        %1257 = vperm.xlu0 %1256, %v1224
        %v1258 = vpop.permute.xlu0 %1257
        %v1260 = vmul.f32 %v266, %v1258
        %v1261 = vadd.f32 %v1255, %v1260
        %1262 = vset.pattern.permute.xlu0 3
        %1263 = vperm.xlu0 %1262, %v1224
        %v1264 = vpop.permute.xlu0 %1263
        %v1266 = vmul.f32 %v267, %v1264
        %v1267 = vadd.f32 %v1261, %v1266
        %1268 = vset.pattern.permute.xlu0 4
        %1269 = vperm.xlu0 %1268, %v1224
        %v1270 = vpop.permute.xlu0 %1269
        %v1272 = vmul.f32 %v268, %v1270
        %v1273 = vadd.f32 %v1267, %v1272
        %1274 = vset.pattern.permute.xlu0 5
        %1275 = vperm.xlu0 %1274, %v1224
        %v1276 = vpop.permute.xlu0 %1275
        %v1278 = vmul.f32 %v269, %v1276
        %v1279 = vadd.f32 %v1273, %v1278
        %1280 = vset.pattern.permute.xlu0 6
        %1281 = vperm.xlu0 %1280, %v1224
        %v1282 = vpop.permute.xlu0 %1281
        %v1284 = vmul.f32 %v270, %v1282
        %v1285 = vadd.f32 %v1279, %v1284
        %1286 = vset.pattern.permute.xlu0 7
        %1287 = vperm.xlu0 %1286, %v1224
        %v1288 = vpop.permute.xlu0 %1287
        %v1290 = vmul.f32 %v271, %v1288
        %v1291 = vadd.f32 %v1285, %v1290
        %v1292 = vrcp.pop %v1243
        %v1293 = vmul.f32 %v1291, %v1292
        %v1294 = vld [vmem:[%s4] sm:$0xff]
        %v1295 = vld [vmem:[%s4 + $0x8] sm:$0xff]
        %v1296 = vld [vmem:[%s4 + $0x10] sm:$0xff]
        %v1297 = vld [vmem:[%s4 + $0x18] sm:$0xff]
        %v1298 = vld [vmem:[%s4 + $0x20] sm:$0xff]
        %v1299 = vld [vmem:[%s4 + $0x28] sm:$0xff]
        %v1300 = vld [vmem:[%s4 + $0x30] sm:$0xff]
        %v1301 = vld [vmem:[%s4 + $0x38] sm:$0xff]
        %v1302 = vld [vmem:[%s4 + $0x40] sm:$0xff]
        %v1303 = vld [vmem:[%s4 + $0x48] sm:$0xff]
        %v1304 = vld [vmem:[%s4 + $0x50] sm:$0xff]
        %v1305 = vld [vmem:[%s4 + $0x58] sm:$0xff]
        %v1306 = vld [vmem:[%s4 + $0x60] sm:$0xff]
        %v1307 = vld [vmem:[%s4 + $0x68] sm:$0xff]
        %v1308 = vld [vmem:[%s4 + $0x70] sm:$0xff]
        %v1309 = vld [vmem:[%s4 + $0x78] sm:$0xff]
        %v1310 = vld [vmem:[%s5] sm:$0x1]
        %v1312 = vlaneseq
        %v1313 = vshrl.u32 %v1312, 7
        %v1314 = vsub.s32 0, %v1313
        %v1315 = vrot.slane %v1310, %v1314
        %1317 = vmatprep.subr.mxu0 0.0
        %1318 = vmatpush1.msra.mxu0 %v1294
        %1319 = vmatprep.subr.mxu0 0.0
        %1320 = vmatpush1.msra.mxu0 %v1295
        %1321 = vmatprep.subr.mxu0 0.0
        %1322 = vmatpush1.msra.mxu0 %v1296
        %1323 = vmatprep.subr.mxu0 0.0
        %1324 = vmatpush1.msra.mxu0 %v1297
        %1325 = vmatprep.subr.mxu0 0.0
        %1326 = vmatpush1.msra.mxu0 %v1298
        %1327 = vmatprep.subr.mxu0 0.0
        %1328 = vmatpush1.msra.mxu0 %v1299
        %1329 = vmatprep.subr.mxu0 0.0
        %1330 = vmatpush1.msra.mxu0 %v1300
        %1331 = vmatprep.subr.mxu0 0.0
        %1332 = vmatpush1.msra.mxu0 %v1301
        %1333 = vmatprep.subr.mxu0 0.0
        %1334 = vmatpush1.msra.mxu0 %v1302
        %1335 = vmatprep.subr.mxu0 0.0
        %1336 = vmatpush1.msra.mxu0 %v1303
        %1337 = vmatprep.subr.mxu0 0.0
        %1338 = vmatpush1.msra.mxu0 %v1304
        %1339 = vmatprep.subr.mxu0 0.0
        %1340 = vmatpush1.msra.mxu0 %v1305
        %1341 = vmatprep.subr.mxu0 0.0
        %1342 = vmatpush1.msra.mxu0 %v1306
        %1343 = vmatprep.subr.mxu0 0.0
        %1344 = vmatpush1.msra.mxu0 %v1307
        %1345 = vmatprep.subr.mxu0 0.0
        %1346 = vmatpush1.msra.mxu0 %v1308
        %1347 = vmatprep.subr.mxu0 0.0
        %1348 = vmatpush1.msra.mxu0 %v1309
        %1349 = vmatprep.subr.mxu0 0.0
        %1350 = vmatpush1.msra.mxu0 0.0
        %1351 = vmatprep.subr.mxu0 0.0
        %1352 = vmatpush1.msra.mxu0 0.0
        %1353 = vmatprep.subr.mxu0 0.0
        %1354 = vmatpush1.msra.mxu0 0.0
        %1355 = vmatprep.subr.mxu0 0.0
        %1356 = vmatpush1.msra.mxu0 0.0
        %1357 = vmatprep.subr.mxu0 0.0
        %1358 = vmatpush1.msra.mxu0 0.0
        %1359 = vmatprep.subr.mxu0 0.0
        %1360 = vmatpush1.msra.mxu0 0.0
        %1361 = vmatprep.subr.mxu0 0.0
        %1362 = vmatpush1.msra.mxu0 0.0
        %1363 = vmatprep.subr.mxu0 0.0
        %1364 = vmatpush1.msra.mxu0 0.0
        %1365 = vmatprep.subr.mxu0 0.0
        %1366 = vmatpush1.msra.mxu0 0.0
        %1367 = vmatprep.subr.mxu0 0.0
        %1368 = vmatpush1.msra.mxu0 0.0
        %1369 = vmatprep.subr.mxu0 0.0
        %1370 = vmatpush1.msra.mxu0 0.0
        %1371 = vmatprep.subr.mxu0 0.0
        %1372 = vmatpush1.msra.mxu0 0.0
        %1373 = vmatprep.subr.mxu0 0.0
        %1374 = vmatpush1.msra.mxu0 0.0
        %1375 = vmatprep.subr.mxu0 0.0
        %1376 = vmatpush1.msra.mxu0 0.0
        %1377 = vmatprep.subr.mxu0 0.0
        %1378 = vmatpush1.msra.mxu0 0.0
        %1379 = vmatprep.subr.mxu0 0.0
        %1380 = vmatpush1.msra.mxu0 0.0
        %1381 = vmatprep.mubr.f32.mxu0 0.0
        %1382 = vmatmul.mubr.f32.gmra.mrb[0].mxu0 %v1293
        %v1383 = vpop.f32.mrb[0].mxu0
        %v1384 = vadd.f32 %v1315, %v1383
        %v1385 = vpop.f32.mrb[0].mxu0
        %1386 = vdwg.mxu0
        %vm1387 = vcmask 97280
        %1388 = vst.msk [vmem:[%s258] sm:$0xff] %vm1387, %v1384
        %s1389 = sand.u32 %s160, 1
        %s1390 = scalar_lea.sflag [#allocation3], %s1389
        %s1391 = sand.u32 %s160, 1
        %s1392 = smul.addr %s1391, 8
        %s1393 = scalar_lea.vmem [#allocation5], %s1392
        // Predicated region
        $region49: #{tpu_custom_call.1} parent=43 // pred_check
          %p1394 = pneg %p170
        $region50: #{tpu_custom_call.1} parent=43 // pred_check_branch
          %1396 = sbr.rel (%p1394) target = $region52
        $region51: #{tpu_custom_call.1} parent=43 // pred_region
          %s1398 = ssub.s32 128, 128
          %1399 = vsyncadd %s1390, %s1398
          %s1400 = smul.addr %s21, 128
          %s1401 = scalar_lea.hbm %s6, %s1400
          %s1403 = sshll.u32 %s1393, 4
          %s1404 = int_to_ptr.vmem [resolvable:$true] %s1403
          %1406 = dma.vmem_to_hbm [thread:$0]  %s1404, 128, %s1401, %s1390
        $region52: #{tpu_custom_call.1} parent=43 // pred_fallthru
          _
      $region44: #{tpu_custom_call.1} parent=5 // pred_fallthru
        _
      %p1407 = scmp.le.s32.totalorder 2, %s16
      // Predicated region
      $region53: #{tpu_custom_call.1} parent=5 // pred_check
        %p1408 = pneg %p1407
      $region54: #{tpu_custom_call.1} parent=5 // pred_check_branch
        %1410 = sbr.rel (%p1408) target = $region56
      $region55: #{tpu_custom_call.1} parent=5 // pred_region
        %s1411 = ssub.s32 %s16, 2
        // Predicated region
        $region57: #{tpu_custom_call.1} parent=55 // pred_check
          %p1412 = pneg %p176
        $region58: #{tpu_custom_call.1} parent=55 // pred_check_branch
          %1414 = sbr.rel (%p1412) target = $region60
        $region59: #{tpu_custom_call.1} parent=55 // pred_region
          %s1415 = sand.u32 %s161, 1
          %s1416 = scalar_lea.sflag [#allocation3], %s1415
          %s1417 = sand.u32 %s161, 1
          %s1418 = smul.addr %s1417, 8
          %s1419 = scalar_lea.vmem [#allocation5], %s1418
          %1420 = dma.done %s1416, 128
        $region60: #{tpu_custom_call.1} parent=55 // pred_fallthru
          _
      $region56: #{tpu_custom_call.1} parent=5 // pred_fallthru
        _
    $region6: #{tpu_custom_call.1} parent=1 // loop_footer
      %s20 = sadd.s32 1, %s16
    $region7: #{tpu_custom_call.1} parent=1 // loop_footer_branch
      %15 = sbr.rel target = $region3
    $region8: #{tpu_custom_call.1} parent=1 // loop_exit
      _
    %1421 = vsyncpa [#allocation3], 1
    %s1422 = scalar_lea.sflag [#allocation3], 1
    %1423 = vsyncpa %s1422, 1
    %1424 = vsyncpa [#allocation4], 1
    %s1425 = scalar_lea.sflag [#allocation4], 1
    %1426 = vsyncpa %s1425, 1

</llo_original>
